<compile_context>
chip_gen: v7x
topology: tpu7x:2x2x1
jax: 0.10.0
libtpu: 0.0.40
codegen_flags: <defaults>
</compile_context>

<pallas_src>
import functools

import jax
import jax.numpy as jnp
from jax import lax
from jax.experimental import pallas as pl
from jax.experimental.pallas import tpu as pltpu

BN_EPS = 1e-5
# MXU / slab storage dtype.  bf16 doubles MXU rate and halves slab bytes on
# v5e/v6e/v7x; accumulation and all elementwise math stay f32.  Set to
# jnp.float32 for bit-exact-vs-PyTorch numerics.
COMPUTE_DTYPE = jnp.bfloat16


def _round_up(x, m):
    return (x + m - 1) // m * m


def _slab_bytes(rows, cols, dtype):
    sub, item = (16, 2) if dtype == jnp.bfloat16 else (8, 4)
    return _round_up(max(rows, 1), sub) * _round_up(max(cols, 1), 128) * item


def _trans_basic_block_kernel(xflat_ref, mask_ref,
                              w1_ref, g1_ref, b1_ref,
                              w2_ref, g2_ref, b2_ref,
                              out_ref, act1_ref, col_ref,
                              *, Cp, L1, Lout, A, X, Wp, cnt):
    # xflat_ref : (Cp, Lx)   bf16  -- zero-padded flattened input grid;
    #                                 grid index p lives at column X + p
    # mask_ref  : (1, L1)    f32   -- 1.0 at real HxW pixels; column c <-> p = c - A
    # w*_ref    : (Cp, 9*Cp) bf16  -- K-stacked conv weights (tap-major, cin-minor)
    # g*/b*_ref : (Cp, 1)    f32   -- BatchNorm affine params
    # out_ref   : (Cp, Lout) f32   -- lane-dense output slab; column c <-> grid c
    # act1_ref  : (Cp, L1)   bf16  -- relu(bn1(conv1(x))), zeroed halo; col c <-> c - A
    # col_ref   : (9*Cp, L1) bf16  -- im2col scratch, reused by both convs
    inv_cnt = 1.0 / float(cnt)
    taps = [(di - 1) * Wp + (dj - 1) for di in range(3) for dj in range(3)]

    def im2col(src_ref, origin, length):
        # 9 shifted copies of the source slab into the K-stacked MXU operand.
        # The lane-misaligned tap shifts are paid exactly once per conv here.
        for k, d in enumerate(taps):
            s = origin + d                                   # static, >= 0
            col_ref[k * Cp:(k + 1) * Cp, :length] = src_ref[:, s:s + length]

    def bn_scale_bias(acc, mask, g_ref, b_ref):
        # Training-mode BN folded to per-channel scale/bias (single fused
        # sum / sum-of-squares pass over the masked interior; rsqrt on EUP).
        xm = acc * mask
        s = jnp.sum(xm, axis=1, keepdims=True)
        ss = jnp.sum(xm * xm, axis=1, keepdims=True)
        mean = s * inv_cnt
        var = ss * inv_cnt - mean * mean
        scale = g_ref[...] * lax.rsqrt(var + BN_EPS)
        bias = b_ref[...] - mean * scale
        return scale, bias

    mask1 = mask_ref[...]                       # (1, L1), conv1/act1 span
    mask2 = mask_ref[:, A:A + Lout]             # lane-aligned (A % 128 == 0)

    # conv1 (single K-stacked MXU matmul) -> bn1 -> relu -> masked bf16 store.
    # The mask also supplies conv2's zero padding.
    im2col(xflat_ref, X - A, L1)
    acc1 = jnp.dot(w1_ref[...], col_ref[...],
                   preferred_element_type=jnp.float32)
    s1, o1 = bn_scale_bias(acc1, mask1, g1_ref, b1_ref)
    act1_ref[...] = (jnp.maximum(acc1 * s1 + o1, 0.0) * mask1).astype(act1_ref.dtype)

    # conv2 -> bn2
    im2col(act1_ref, A, Lout)
    acc2 = jnp.dot(w2_ref[...], col_ref[:, :Lout],
                   preferred_element_type=jnp.float32)
    s2, o2 = bn_scale_bias(acc2, mask2, g2_ref, b2_ref)

    # residual add (block-aligned identity view) + relu; non-interior columns
    # are don't-care and cropped by the wrapper.
    identity = xflat_ref[:, X:X + Lout].astype(jnp.float32)
    out_ref[...] = jnp.maximum(acc2 * s2 + o2 + identity, 0.0)


def trans_basic_block(x_nchw, params):
    """x_nchw: (N, C, H, W) float32 (PyTorch layout)."""
    w1, g1, b1, w2, g2, b2 = params
    N, C, H, W = x_nchw.shape
    assert w1.shape == (C, C, 3, 3) and w2.shape == (C, C, 3, 3), \
        "default TransBasicBlock path requires planes == inplanes, stride=1"

    Hp, Wp = H + 2, W + 2
    G = Wp + 1                                  # max |flat offset| of a 3x3 tap
    L = N * Hp * Wp                             # flattened padded-grid length
    SUB = 16 if COMPUTE_DTYPE == jnp.bfloat16 else 8
    Cp = _round_up(max(C, SUB), SUB)            # sublane-padded channel count
    Lout = _round_up(L, 128)                    # output span (column c <-> grid c)
    A = _round_up(G, 128)                       # act1 origin (>= G, aligned)
    L1 = _round_up(A + Lout + G, 128)           # conv1 / act1 span
    X = _round_up(A + G, 128)                   # xflat origin (aligned identity)
    Lx = _round_up(X - A + G + L1, 128)         # input-slab span (covers conv1 halo)
    cnt = N * H * W                             # BN population (interior pixels)
    f32 = jnp.float32

    # NCHW -> channel-major lane-dense slab with zero halo margins.
    x_c = jnp.transpose(x_nchw.astype(f32), (1, 0, 2, 3))            # (C,N,H,W)
    xg = jnp.pad(x_c, ((0, 0), (0, 0), (1, 1), (1, 1))).reshape(C, L)
    xflat = jnp.pad(xg, ((0, Cp - C), (X, Lx - X - L))).astype(COMPUTE_DTYPE)

    # Single interior mask (shape-constant => folded under jit): column c is
    # 1.0 iff grid index c - A is a real HxW pixel.
    m = jnp.zeros((N, Hp, Wp), f32).at[:, 1:H + 1, 1:W + 1].set(1.0).reshape(-1)
    mask = jnp.zeros((1, L1), f32).at[0, A:A + L].set(m)

    def stack_w(w):
        # (Cout, Cin, 3, 3) -> (Cp, 9*Cp), tap-major / cin-minor, matching the
        # im2col row-block layout.  Pre-cast to the MXU input dtype.
        wt = jnp.transpose(w.astype(f32), (0, 2, 3, 1))               # (Co,3,3,Ci)
        wt = jnp.pad(wt, ((0, Cp - C), (0, 0), (0, 0), (0, Cp - C)))
        return wt.reshape(Cp, 9 * Cp).astype(COMPUTE_DTYPE)

    def pad_vec(v, fill):
        return jnp.pad(v.astype(f32), (0, Cp - C),
                       constant_values=fill).reshape(Cp, 1)

    w1s, w2s = stack_w(w1), stack_w(w2)
    g1c, b1c = pad_vec(g1, 1.0), pad_vec(b1, 0.0)
    g2c, b2c = pad_vec(g2, 1.0), pad_vec(b2, 0.0)

    kernel = functools.partial(_trans_basic_block_kernel,
                               Cp=Cp, L1=L1, Lout=Lout, A=A, X=X, Wp=Wp, cnt=cnt)
    vmem = pl.BlockSpec(memory_space=pltpu.MemorySpace.VMEM)

    # Shape-derived VMEM budget (replaces the old hard-coded 32 MiB); capped
    # at 48 MiB so the same kernel stays inside v7x's 64 MiB VMEM.
    need = (_slab_bytes(Cp, Lx, COMPUTE_DTYPE)           # input slab
            + _slab_bytes(1, L1, f32)                    # interior mask
            + 2 * _slab_bytes(Cp, 9 * Cp, COMPUTE_DTYPE) # stacked weights
            + 4 * _slab_bytes(Cp, 1, f32)                # BN affine params
            + _slab_bytes(Cp, Lout, f32)                 # output slab
            + _slab_bytes(Cp, L1, COMPUTE_DTYPE)         # act1 scratch
            + _slab_bytes(9 * Cp, L1, COMPUTE_DTYPE)     # im2col scratch
            + 4 * _slab_bytes(Cp, L1, f32))              # f32 temporaries / spill
    vmem_limit = int(min(max(32 << 20, 2 * need), 48 << 20))

    out_flat = pl.pallas_call(
        kernel,
        out_shape=jax.ShapeDtypeStruct((Cp, Lout), jnp.float32),
        in_specs=[vmem] * 8,
        out_specs=vmem,
        scratch_shapes=[pltpu.VMEM((Cp, L1), COMPUTE_DTYPE),      # act1
                        pltpu.VMEM((9 * Cp, L1), COMPUTE_DTYPE)], # im2col
        compiler_params=pltpu.CompilerParams(vmem_limit_bytes=vmem_limit),
    )(xflat, mask, w1s, g1c, b1c, w2s, g2c, b2c)

    # (Cp, Lout) -> (N, C, H, W): drop channel/tail padding, unflatten the
    # padded grid, crop the halo ring.
    out = out_flat[:C, :L].reshape(C, N, Hp, Wp)[:, :, 1:H + 1, 1:W + 1]
    return jnp.transpose(out, (1, 0, 2, 3))


def _ref_forward(x, params, quantize=False):
    """Pure-JAX reference replicating the PyTorch forward (training-mode BN).

    quantize=True mirrors the kernel's bf16 MXU-input quantization (conv
    inputs / weights / residual cast through bf16; accumulation & BN in f32).
    """
    w1, g1, b1, w2, g2, b2 = params
    if quantize:
        q = lambda a: a.astype(COMPUTE_DTYPE).astype(jnp.float32)
    else:
        q = lambda a: a

    def conv(x, w):
        return lax.conv_general_dilated(
            x, w, window_strides=(1, 1), padding=((1, 1), (1, 1)),
            dimension_numbers=('NCHW', 'OIHW', 'NCHW'),
            precision=lax.Precision.HIGHEST)

    def bn(x, g, b):
        m = jnp.mean(x, axis=(0, 2, 3), keepdims=True)
        v = jnp.mean((x - m) ** 2, axis=(0, 2, 3), keepdims=True)
        return ((x - m) * lax.rsqrt(v + BN_EPS)
                * g[None, :, None, None] + b[None, :, None, None])

    out = jax.nn.relu(bn(conv(q(x), q(w1)), g1, b1))
    out = bn(conv(q(out), q(w2)), g2, b2)
    return jax.nn.relu(out + q(x))


if __name__ == "__main__":
    N, C, H, W = 2, 4, 16, 16            # inplanes = planes = 4
    key = jax.random.PRNGKey(0)
    k_x, k_w1, k_w2 = jax.random.split(key, 3)

    x = jax.random.normal(k_x, (N, C, H, W), jnp.float32)
    # conv3x3 weights: (out_ch, in_ch, 3, 3), bias=False
    w1 = jax.random.normal(k_w1, (C, C, 3, 3), jnp.float32) * 0.1
    w2 = jax.random.normal(k_w2, (C, C, 3, 3), jnp.float32) * 0.1
    # BatchNorm2d default init: weight=1, bias=0
    g1 = jnp.ones((C,), jnp.float32); b1 = jnp.zeros((C,), jnp.float32)
    g2 = jnp.ones((C,), jnp.float32); b2 = jnp.zeros((C,), jnp.float32)
    params = (w1, g1, b1, w2, g2, b2)

    out = jax.block_until_ready(jax.jit(trans_basic_block)(x, params))
    assert out.shape == (N, C, H, W)

    # Primary gate: reference applying the exact same bf16 input/weight
    # quantization as the kernel (accumulation & BN stay f32) -> tight match.
    ref_q = _ref_forward(x, params, quantize=True)
    if not jnp.allclose(out, ref_q, rtol=5e-3, atol=5e-3):
        raise AssertionError(
            "mismatch vs quantization-aware reference: max abs err = %g"
            % float(jnp.max(jnp.abs(out - ref_q))))

    # Sanity bound vs the pure-f32 PyTorch-equivalent reference; the only
    # difference is the documented bf16 MXU-input quantization.
    ref_f = _ref_forward(x, params, quantize=False)
    if not jnp.allclose(out, ref_f, rtol=1e-1, atol=1e-1):
        raise AssertionError(
            "mismatch vs f32 reference: max abs err = %g"
            % float(jnp.max(jnp.abs(out - ref_f))))

    print("KERNEL_OK")
</pallas_src>

<mosaic_0001>
module attributes {stable_mosaic.version = 11 : i64} {
  func.func @_trans_basic_block_kernel(%arg0: memref<16x1280xbf16, #tpu.memory_space<vmem>>, %arg1: memref<1x1024xf32, #tpu.memory_space<vmem>>, %arg2: memref<16x144xbf16, #tpu.memory_space<vmem>>, %arg3: memref<16x1xf32, #tpu.memory_space<vmem>>, %arg4: memref<16x1xf32, #tpu.memory_space<vmem>>, %arg5: memref<16x144xbf16, #tpu.memory_space<vmem>>, %arg6: memref<16x1xf32, #tpu.memory_space<vmem>>, %arg7: memref<16x1xf32, #tpu.memory_space<vmem>>, %arg8: memref<16x768xf32, #tpu.memory_space<vmem>>, %arg9: memref<16x1024xbf16, #tpu.memory_space<vmem>>, %arg10: memref<144x1024xbf16, #tpu.memory_space<vmem>>) attributes {dimension_semantics = [], scalar_prefetch = 0 : i64, scratch_operands = 2 : i64, tpu.core_type = #tpu.core_type<tc>} {
    %c0 = arith.constant 0 : index
    %c0_0 = arith.constant 0 : index
    %0 = vector.load %arg1[%c0, %c0_0] : memref<1x1024xf32, #tpu.memory_space<vmem>>, vector<1x1024xf32>
    %c0_1 = arith.constant 0 : index
    %c128 = arith.constant 128 : index
    %1 = vector.load %arg1[%c0_1, %c128] : memref<1x1024xf32, #tpu.memory_space<vmem>>, vector<1x768xf32>
    %c0_2 = arith.constant 0 : index
    %c109 = arith.constant 109 : index
    %2 = vector.load %arg0[%c0_2, %c109] : memref<16x1280xbf16, #tpu.memory_space<vmem>>, vector<16x1024xbf16>
    %c0_3 = arith.constant 0 : index
    %c0_4 = arith.constant 0 : index
    %3 = vector.load %arg10[%c0_3, %c0_4] : memref<144x1024xbf16, #tpu.memory_space<vmem>>, vector<16x1024xbf16>
    tpu.vector_store %arg10[%c0_3, %c0_4], %2 {strides = array<i32>} : memref<144x1024xbf16, #tpu.memory_space<vmem>>, vector<16x1024xbf16>,
    %c0_5 = arith.constant 0 : index
    %c110 = arith.constant 110 : index
    %4 = vector.load %arg0[%c0_5, %c110] : memref<16x1280xbf16, #tpu.memory_space<vmem>>, vector<16x1024xbf16>
    %c16 = arith.constant 16 : index
    %c0_6 = arith.constant 0 : index
    %5 = vector.load %arg10[%c16, %c0_6] : memref<144x1024xbf16, #tpu.memory_space<vmem>>, vector<16x1024xbf16>
    tpu.vector_store %arg10[%c16, %c0_6], %4 {strides = array<i32>} : memref<144x1024xbf16, #tpu.memory_space<vmem>>, vector<16x1024xbf16>,
    %c0_7 = arith.constant 0 : index
    %c111 = arith.constant 111 : index
    %6 = vector.load %arg0[%c0_7, %c111] : memref<16x1280xbf16, #tpu.memory_space<vmem>>, vector<16x1024xbf16>
    %c32 = arith.constant 32 : index
    %c0_8 = arith.constant 0 : index
    %7 = vector.load %arg10[%c32, %c0_8] : memref<144x1024xbf16, #tpu.memory_space<vmem>>, vector<16x1024xbf16>
    tpu.vector_store %arg10[%c32, %c0_8], %6 {strides = array<i32>} : memref<144x1024xbf16, #tpu.memory_space<vmem>>, vector<16x1024xbf16>,
    %c0_9 = arith.constant 0 : index
    %c127 = arith.constant 127 : index
    %8 = vector.load %arg0[%c0_9, %c127] : memref<16x1280xbf16, #tpu.memory_space<vmem>>, vector<16x1024xbf16>
    %c48 = arith.constant 48 : index
    %c0_10 = arith.constant 0 : index
    %9 = vector.load %arg10[%c48, %c0_10] : memref<144x1024xbf16, #tpu.memory_space<vmem>>, vector<16x1024xbf16>
    tpu.vector_store %arg10[%c48, %c0_10], %8 {strides = array<i32>} : memref<144x1024xbf16, #tpu.memory_space<vmem>>, vector<16x1024xbf16>,
    %c0_11 = arith.constant 0 : index
    %c128_12 = arith.constant 128 : index
    %10 = vector.load %arg0[%c0_11, %c128_12] : memref<16x1280xbf16, #tpu.memory_space<vmem>>, vector<16x1024xbf16>
    %c64 = arith.constant 64 : index
    %c0_13 = arith.constant 0 : index
    %11 = vector.load %arg10[%c64, %c0_13] : memref<144x1024xbf16, #tpu.memory_space<vmem>>, vector<16x1024xbf16>
    tpu.vector_store %arg10[%c64, %c0_13], %10 {strides = array<i32>} : memref<144x1024xbf16, #tpu.memory_space<vmem>>, vector<16x1024xbf16>,
    %c0_14 = arith.constant 0 : index
    %c129 = arith.constant 129 : index
    %12 = vector.load %arg0[%c0_14, %c129] : memref<16x1280xbf16, #tpu.memory_space<vmem>>, vector<16x1024xbf16>
    %c80 = arith.constant 80 : index
    %c0_15 = arith.constant 0 : index
    %13 = vector.load %arg10[%c80, %c0_15] : memref<144x1024xbf16, #tpu.memory_space<vmem>>, vector<16x1024xbf16>
    tpu.vector_store %arg10[%c80, %c0_15], %12 {strides = array<i32>} : memref<144x1024xbf16, #tpu.memory_space<vmem>>, vector<16x1024xbf16>,
    %c0_16 = arith.constant 0 : index
    %c145 = arith.constant 145 : index
    %14 = vector.load %arg0[%c0_16, %c145] : memref<16x1280xbf16, #tpu.memory_space<vmem>>, vector<16x1024xbf16>
    %c96 = arith.constant 96 : index
    %c0_17 = arith.constant 0 : index
    %15 = vector.load %arg10[%c96, %c0_17] : memref<144x1024xbf16, #tpu.memory_space<vmem>>, vector<16x1024xbf16>
    tpu.vector_store %arg10[%c96, %c0_17], %14 {strides = array<i32>} : memref<144x1024xbf16, #tpu.memory_space<vmem>>, vector<16x1024xbf16>,
    %c0_18 = arith.constant 0 : index
    %c146 = arith.constant 146 : index
    %16 = vector.load %arg0[%c0_18, %c146] : memref<16x1280xbf16, #tpu.memory_space<vmem>>, vector<16x1024xbf16>
    %c112 = arith.constant 112 : index
    %c0_19 = arith.constant 0 : index
    %17 = vector.load %arg10[%c112, %c0_19] : memref<144x1024xbf16, #tpu.memory_space<vmem>>, vector<16x1024xbf16>
    tpu.vector_store %arg10[%c112, %c0_19], %16 {strides = array<i32>} : memref<144x1024xbf16, #tpu.memory_space<vmem>>, vector<16x1024xbf16>,
    %c0_20 = arith.constant 0 : index
    %c147 = arith.constant 147 : index
    %18 = vector.load %arg0[%c0_20, %c147] : memref<16x1280xbf16, #tpu.memory_space<vmem>>, vector<16x1024xbf16>
    %c128_21 = arith.constant 128 : index
    %c0_22 = arith.constant 0 : index
    %19 = vector.load %arg10[%c128_21, %c0_22] : memref<144x1024xbf16, #tpu.memory_space<vmem>>, vector<16x1024xbf16>
    tpu.vector_store %arg10[%c128_21, %c0_22], %18 {strides = array<i32>} : memref<144x1024xbf16, #tpu.memory_space<vmem>>, vector<16x1024xbf16>,
    %c0_23 = arith.constant 0 : index
    %c0_24 = arith.constant 0 : index
    %20 = vector.load %arg2[%c0_23, %c0_24] : memref<16x144xbf16, #tpu.memory_space<vmem>>, vector<16x144xbf16>
    %c0_25 = arith.constant 0 : index
    %c0_26 = arith.constant 0 : index
    %21 = vector.load %arg10[%c0_25, %c0_26] : memref<144x1024xbf16, #tpu.memory_space<vmem>>, vector<144x1024xbf16>
    %cst = arith.constant dense<0.000000e+00> : vector<16x1024xf32>
    %22 = tpu.matmul %20, %21, %cst {dimension_numbers = #tpu.dot_dimension_numbers<[1], [0], [0], [1], [0, 0, 1, 1], [], []>} : vector<16x144xbf16>, vector<144x1024xbf16>, vector<16x1024xf32> -> vector<16x1024xf32>
    %23 = vector.broadcast %0 : vector<1x1024xf32> to vector<16x1024xf32>
    %24 = arith.mulf %22, %23 : vector<16x1024xf32>
    %cst_27 = arith.constant dense<0.000000e+00> : vector<16xf32>
    %25 = vector.multi_reduction <add>, %24, %cst_27 [1] : vector<16x1024xf32> to vector<16xf32>
    %26 = vector.shape_cast %25 : vector<16xf32> to vector<16x1xf32>
    %27 = arith.mulf %24, %24 : vector<16x1024xf32>
    %cst_28 = arith.constant dense<0.000000e+00> : vector<16xf32>
    %28 = vector.multi_reduction <add>, %27, %cst_28 [1] : vector<16x1024xf32> to vector<16xf32>
    %29 = vector.shape_cast %28 : vector<16xf32> to vector<16x1xf32>
    %cst_29 = arith.constant 0.001953125 : f32
    %30 = vector.broadcast %cst_29 : f32 to vector<16x1xf32>
    %31 = arith.mulf %26, %30 : vector<16x1xf32>
    %cst_30 = arith.constant 0.001953125 : f32
    %32 = vector.broadcast %cst_30 : f32 to vector<16x1xf32>
    %33 = arith.mulf %29, %32 : vector<16x1xf32>
    %34 = arith.mulf %31, %31 : vector<16x1xf32>
    %35 = arith.subf %33, %34 : vector<16x1xf32>
    %c0_31 = arith.constant 0 : index
    %c0_32 = arith.constant 0 : index
    %36 = vector.load %arg3[%c0_31, %c0_32] : memref<16x1xf32, #tpu.memory_space<vmem>>, vector<16x1xf32>
    %cst_33 = arith.constant 9.99999974E-6 : f32
    %37 = vector.broadcast %cst_33 : f32 to vector<16x1xf32>
    %38 = arith.addf %35, %37 : vector<16x1xf32>
    %39 = math.rsqrt %38 : vector<16x1xf32>
    %40 = arith.mulf %36, %39 : vector<16x1xf32>
    %c0_34 = arith.constant 0 : index
    %c0_35 = arith.constant 0 : index
    %41 = vector.load %arg4[%c0_34, %c0_35] : memref<16x1xf32, #tpu.memory_space<vmem>>, vector<16x1xf32>
    %42 = arith.mulf %31, %40 : vector<16x1xf32>
    %43 = arith.subf %41, %42 : vector<16x1xf32>
    %44 = vector.broadcast %40 : vector<16x1xf32> to vector<16x1024xf32>
    %45 = arith.mulf %22, %44 : vector<16x1024xf32>
    %46 = vector.broadcast %43 : vector<16x1xf32> to vector<16x1024xf32>
    %47 = arith.addf %45, %46 : vector<16x1024xf32>
    %cst_36 = arith.constant 0.000000e+00 : f32
    %48 = vector.broadcast %cst_36 : f32 to vector<16x1024xf32>
    %49 = arith.maximumf %47, %48 : vector<16x1024xf32>
    %50 = vector.broadcast %0 : vector<1x1024xf32> to vector<16x1024xf32>
    %51 = arith.mulf %49, %50 : vector<16x1024xf32>
    %52 = arith.truncf %51 : vector<16x1024xf32> to vector<16x1024xbf16>
    %c0_37 = arith.constant 0 : index
    %c0_38 = arith.constant 0 : index
    %53 = vector.load %arg9[%c0_37, %c0_38] : memref<16x1024xbf16, #tpu.memory_space<vmem>>, vector<16x1024xbf16>
    tpu.vector_store %arg9[%c0_37, %c0_38], %52 {strides = array<i32>} : memref<16x1024xbf16, #tpu.memory_space<vmem>>, vector<16x1024xbf16>,
    %c0_39 = arith.constant 0 : index
    %c109_40 = arith.constant 109 : index
    %54 = vector.load %arg9[%c0_39, %c109_40] : memref<16x1024xbf16, #tpu.memory_space<vmem>>, vector<16x768xbf16>
    %c0_41 = arith.constant 0 : index
    %c0_42 = arith.constant 0 : index
    %55 = vector.load %arg10[%c0_41, %c0_42] : memref<144x1024xbf16, #tpu.memory_space<vmem>>, vector<16x768xbf16>
    tpu.vector_store %arg10[%c0_41, %c0_42], %54 {strides = array<i32>} : memref<144x1024xbf16, #tpu.memory_space<vmem>>, vector<16x768xbf16>,
    %c0_43 = arith.constant 0 : index
    %c110_44 = arith.constant 110 : index
    %56 = vector.load %arg9[%c0_43, %c110_44] : memref<16x1024xbf16, #tpu.memory_space<vmem>>, vector<16x768xbf16>
    %c16_45 = arith.constant 16 : index
    %c0_46 = arith.constant 0 : index
    %57 = vector.load %arg10[%c16_45, %c0_46] : memref<144x1024xbf16, #tpu.memory_space<vmem>>, vector<16x768xbf16>
    tpu.vector_store %arg10[%c16_45, %c0_46], %56 {strides = array<i32>} : memref<144x1024xbf16, #tpu.memory_space<vmem>>, vector<16x768xbf16>,
    %c0_47 = arith.constant 0 : index
    %c111_48 = arith.constant 111 : index
    %58 = vector.load %arg9[%c0_47, %c111_48] : memref<16x1024xbf16, #tpu.memory_space<vmem>>, vector<16x768xbf16>
    %c32_49 = arith.constant 32 : index
    %c0_50 = arith.constant 0 : index
    %59 = vector.load %arg10[%c32_49, %c0_50] : memref<144x1024xbf16, #tpu.memory_space<vmem>>, vector<16x768xbf16>
    tpu.vector_store %arg10[%c32_49, %c0_50], %58 {strides = array<i32>} : memref<144x1024xbf16, #tpu.memory_space<vmem>>, vector<16x768xbf16>,
    %c0_51 = arith.constant 0 : index
    %c127_52 = arith.constant 127 : index
    %60 = vector.load %arg9[%c0_51, %c127_52] : memref<16x1024xbf16, #tpu.memory_space<vmem>>, vector<16x768xbf16>
    %c48_53 = arith.constant 48 : index
    %c0_54 = arith.constant 0 : index
    %61 = vector.load %arg10[%c48_53, %c0_54] : memref<144x1024xbf16, #tpu.memory_space<vmem>>, vector<16x768xbf16>
    tpu.vector_store %arg10[%c48_53, %c0_54], %60 {strides = array<i32>} : memref<144x1024xbf16, #tpu.memory_space<vmem>>, vector<16x768xbf16>,
    %c0_55 = arith.constant 0 : index
    %c128_56 = arith.constant 128 : index
    %62 = vector.load %arg9[%c0_55, %c128_56] : memref<16x1024xbf16, #tpu.memory_space<vmem>>, vector<16x768xbf16>
    %c64_57 = arith.constant 64 : index
    %c0_58 = arith.constant 0 : index
    %63 = vector.load %arg10[%c64_57, %c0_58] : memref<144x1024xbf16, #tpu.memory_space<vmem>>, vector<16x768xbf16>
    tpu.vector_store %arg10[%c64_57, %c0_58], %62 {strides = array<i32>} : memref<144x1024xbf16, #tpu.memory_space<vmem>>, vector<16x768xbf16>,
    %c0_59 = arith.constant 0 : index
    %c129_60 = arith.constant 129 : index
    %64 = vector.load %arg9[%c0_59, %c129_60] : memref<16x1024xbf16, #tpu.memory_space<vmem>>, vector<16x768xbf16>
    %c80_61 = arith.constant 80 : index
    %c0_62 = arith.constant 0 : index
    %65 = vector.load %arg10[%c80_61, %c0_62] : memref<144x1024xbf16, #tpu.memory_space<vmem>>, vector<16x768xbf16>
    tpu.vector_store %arg10[%c80_61, %c0_62], %64 {strides = array<i32>} : memref<144x1024xbf16, #tpu.memory_space<vmem>>, vector<16x768xbf16>,
    %c0_63 = arith.constant 0 : index
    %c145_64 = arith.constant 145 : index
    %66 = vector.load %arg9[%c0_63, %c145_64] : memref<16x1024xbf16, #tpu.memory_space<vmem>>, vector<16x768xbf16>
    %c96_65 = arith.constant 96 : index
    %c0_66 = arith.constant 0 : index
    %67 = vector.load %arg10[%c96_65, %c0_66] : memref<144x1024xbf16, #tpu.memory_space<vmem>>, vector<16x768xbf16>
    tpu.vector_store %arg10[%c96_65, %c0_66], %66 {strides = array<i32>} : memref<144x1024xbf16, #tpu.memory_space<vmem>>, vector<16x768xbf16>,
    %c0_67 = arith.constant 0 : index
    %c146_68 = arith.constant 146 : index
    %68 = vector.load %arg9[%c0_67, %c146_68] : memref<16x1024xbf16, #tpu.memory_space<vmem>>, vector<16x768xbf16>
    %c112_69 = arith.constant 112 : index
    %c0_70 = arith.constant 0 : index
    %69 = vector.load %arg10[%c112_69, %c0_70] : memref<144x1024xbf16, #tpu.memory_space<vmem>>, vector<16x768xbf16>
    tpu.vector_store %arg10[%c112_69, %c0_70], %68 {strides = array<i32>} : memref<144x1024xbf16, #tpu.memory_space<vmem>>, vector<16x768xbf16>,
    %c0_71 = arith.constant 0 : index
    %c147_72 = arith.constant 147 : index
    %70 = vector.load %arg9[%c0_71, %c147_72] : memref<16x1024xbf16, #tpu.memory_space<vmem>>, vector<16x768xbf16>
    %c128_73 = arith.constant 128 : index
    %c0_74 = arith.constant 0 : index
    %71 = vector.load %arg10[%c128_73, %c0_74] : memref<144x1024xbf16, #tpu.memory_space<vmem>>, vector<16x768xbf16>
    tpu.vector_store %arg10[%c128_73, %c0_74], %70 {strides = array<i32>} : memref<144x1024xbf16, #tpu.memory_space<vmem>>, vector<16x768xbf16>,
    %c0_75 = arith.constant 0 : index
    %c0_76 = arith.constant 0 : index
    %72 = vector.load %arg5[%c0_75, %c0_76] : memref<16x144xbf16, #tpu.memory_space<vmem>>, vector<16x144xbf16>
    %c0_77 = arith.constant 0 : index
    %c0_78 = arith.constant 0 : index
    %73 = vector.load %arg10[%c0_77, %c0_78] : memref<144x1024xbf16, #tpu.memory_space<vmem>>, vector<144x768xbf16>
    %cst_79 = arith.constant dense<0.000000e+00> : vector<16x768xf32>
    %74 = tpu.matmul %72, %73, %cst_79 {dimension_numbers = #tpu.dot_dimension_numbers<[1], [0], [0], [1], [0, 0, 1, 1], [], []>} : vector<16x144xbf16>, vector<144x768xbf16>, vector<16x768xf32> -> vector<16x768xf32>
    %75 = vector.broadcast %1 : vector<1x768xf32> to vector<16x768xf32>
    %76 = arith.mulf %74, %75 : vector<16x768xf32>
    %cst_80 = arith.constant dense<0.000000e+00> : vector<16xf32>
    %77 = vector.multi_reduction <add>, %76, %cst_80 [1] : vector<16x768xf32> to vector<16xf32>
    %78 = vector.shape_cast %77 : vector<16xf32> to vector<16x1xf32>
    %79 = arith.mulf %76, %76 : vector<16x768xf32>
    %cst_81 = arith.constant dense<0.000000e+00> : vector<16xf32>
    %80 = vector.multi_reduction <add>, %79, %cst_81 [1] : vector<16x768xf32> to vector<16xf32>
    %81 = vector.shape_cast %80 : vector<16xf32> to vector<16x1xf32>
    %cst_82 = arith.constant 0.001953125 : f32
    %82 = vector.broadcast %cst_82 : f32 to vector<16x1xf32>
    %83 = arith.mulf %78, %82 : vector<16x1xf32>
    %cst_83 = arith.constant 0.001953125 : f32
    %84 = vector.broadcast %cst_83 : f32 to vector<16x1xf32>
    %85 = arith.mulf %81, %84 : vector<16x1xf32>
    %86 = arith.mulf %83, %83 : vector<16x1xf32>
    %87 = arith.subf %85, %86 : vector<16x1xf32>
    %c0_84 = arith.constant 0 : index
    %c0_85 = arith.constant 0 : index
    %88 = vector.load %arg6[%c0_84, %c0_85] : memref<16x1xf32, #tpu.memory_space<vmem>>, vector<16x1xf32>
    %cst_86 = arith.constant 9.99999974E-6 : f32
    %89 = vector.broadcast %cst_86 : f32 to vector<16x1xf32>
    %90 = arith.addf %87, %89 : vector<16x1xf32>
    %91 = math.rsqrt %90 : vector<16x1xf32>
    %92 = arith.mulf %88, %91 : vector<16x1xf32>
    %c0_87 = arith.constant 0 : index
    %c0_88 = arith.constant 0 : index
    %93 = vector.load %arg7[%c0_87, %c0_88] : memref<16x1xf32, #tpu.memory_space<vmem>>, vector<16x1xf32>
    %94 = arith.mulf %83, %92 : vector<16x1xf32>
    %95 = arith.subf %93, %94 : vector<16x1xf32>
    %c0_89 = arith.constant 0 : index
    %c256 = arith.constant 256 : index
    %96 = vector.load %arg0[%c0_89, %c256] : memref<16x1280xbf16, #tpu.memory_space<vmem>>, vector<16x768xbf16>
    %97 = arith.extf %96 : vector<16x768xbf16> to vector<16x768xf32>
    %98 = vector.broadcast %92 : vector<16x1xf32> to vector<16x768xf32>
    %99 = arith.mulf %74, %98 : vector<16x768xf32>
    %100 = vector.broadcast %95 : vector<16x1xf32> to vector<16x768xf32>
    %101 = arith.addf %99, %100 : vector<16x768xf32>
    %102 = arith.addf %101, %97 : vector<16x768xf32>
    %cst_90 = arith.constant 0.000000e+00 : f32
    %103 = vector.broadcast %cst_90 : f32 to vector<16x768xf32>
    %104 = arith.maximumf %102, %103 : vector<16x768xf32>
    %c0_91 = arith.constant 0 : index
    %c0_92 = arith.constant 0 : index
    %105 = vector.load %arg8[%c0_91, %c0_92] : memref<16x768xf32, #tpu.memory_space<vmem>>, vector<16x768xf32>
    tpu.vector_store %arg8[%c0_91, %c0_92], %104 {strides = array<i32>} : memref<16x768xf32, #tpu.memory_space<vmem>>, vector<16x768xf32>,
    return
  }
}

</mosaic_0001>

<llo_original>
// kernel: trans_basic_block.1
$region0: #{trans_basic_block.1}
  #allocation0 [shape = 'u32[]', space=smem, size = 0x4, offset = 0x4, fixed_abs, tag = 'smem constant byte address 0x4 - core index']
  #allocation1 [shape = 'u32[144,128]{1,0:T(1,128)}', space=vmem, size = 0x12000, scoped, tag = 'internal scratch']
  #allocation2 [shape = 'bf16[16,1024]{1,0:T(16,128)(2,1)}', space=vmem, size = 0x8000, scoped, tag = 'scratch operand']
  #allocation3 [shape = 'bf16[144,1024]{1,0:T(16,128)(2,1)}', space=vmem, size = 0x48000, scoped, tag = 'scratch operand']
  %s0 = inlined_call_operand.vmem [shape: bf16[16,1280], index: 0, kind: input, shape index: {}]
  %s1 = inlined_call_operand.vmem [shape: f32[1,1024], index: 1, kind: input, shape index: {}]
  %s2 = inlined_call_operand.vmem [shape: bf16[16,144], index: 2, kind: input, shape index: {}]
  %s3 = inlined_call_operand.vmem [shape: f32[16,1], index: 3, kind: input, shape index: {}]
  %s4 = inlined_call_operand.vmem [shape: f32[16,1], index: 4, kind: input, shape index: {}]
  %s5 = inlined_call_operand.vmem [shape: bf16[16,144], index: 5, kind: input, shape index: {}]
  %s6 = inlined_call_operand.vmem [shape: f32[16,1], index: 6, kind: input, shape index: {}]
  %s7 = inlined_call_operand.vmem [shape: f32[16,1], index: 7, kind: input, shape index: {}]
  %s8 = inlined_call_operand.vmem [shape: f32[16,768], index: 8, kind: output, shape index: {}]
  %s9 = sld [smem:[#allocation0]]
  $region42: #{trans_basic_block.1} parent=0
    _
  %s11 = ssub.s32 1, %s9
  %s12 = scalar_select 0, %s11, %s9
  // Predicated region
  $region2: #{trans_basic_block.1} parent=0 // pred_check
    _
  $region3: #{trans_basic_block.1} parent=0 // pred_check_branch
    %14 = sbr.rel (0) target = $region5
  $region4: #{trans_basic_block.1} parent=0 // pred_region
    _
  $region5: #{trans_basic_block.1} parent=0 // pred_fallthru
    _
  // Predicated region
  $region6: #{trans_basic_block.1} parent=0 // pred_check
    _
  $region7: #{trans_basic_block.1} parent=0 // pred_check_branch
    %16 = sbr.rel (0) target = $region9
  $region8: #{trans_basic_block.1} parent=0 // pred_region
    _
  $region9: #{trans_basic_block.1} parent=0 // pred_fallthru
    _
  // Predicated region
  $region10: #{trans_basic_block.1} parent=0 // pred_check
    _
  $region11: #{trans_basic_block.1} parent=0 // pred_check_branch
    %18 = sbr.rel (0) target = $region13
  $region12: #{trans_basic_block.1} parent=0 // pred_region
    _
  $region13: #{trans_basic_block.1} parent=0 // pred_fallthru
    _
  // Predicated region
  $region14: #{trans_basic_block.1} parent=0 // pred_check
    _
  $region15: #{trans_basic_block.1} parent=0 // pred_check_branch
    %20 = sbr.rel (0) target = $region17
  $region16: #{trans_basic_block.1} parent=0 // pred_region
    _
  $region17: #{trans_basic_block.1} parent=0 // pred_fallthru
    _
  // Predicated region
  $region18: #{trans_basic_block.1} parent=0 // pred_check
    _
  $region19: #{trans_basic_block.1} parent=0 // pred_check_branch
    %22 = sbr.rel (0) target = $region21
  $region20: #{trans_basic_block.1} parent=0 // pred_region
    _
  $region21: #{trans_basic_block.1} parent=0 // pred_fallthru
    _
  // Predicated region
  $region22: #{trans_basic_block.1} parent=0 // pred_check
    _
  $region23: #{trans_basic_block.1} parent=0 // pred_check_branch
    %24 = sbr.rel (0) target = $region25
  $region24: #{trans_basic_block.1} parent=0 // pred_region
    _
  $region25: #{trans_basic_block.1} parent=0 // pred_fallthru
    _
  // Predicated region
  $region26: #{trans_basic_block.1} parent=0 // pred_check
    _
  $region27: #{trans_basic_block.1} parent=0 // pred_check_branch
    %26 = sbr.rel (0) target = $region29
  $region28: #{trans_basic_block.1} parent=0 // pred_region
    _
  $region29: #{trans_basic_block.1} parent=0 // pred_fallthru
    _
  // Predicated region
  $region30: #{trans_basic_block.1} parent=0 // pred_check
    _
  $region31: #{trans_basic_block.1} parent=0 // pred_check_branch
    %28 = sbr.rel (0) target = $region33
  $region32: #{trans_basic_block.1} parent=0 // pred_region
    _
  $region33: #{trans_basic_block.1} parent=0 // pred_fallthru
    _
  %v30 = vld [vmem:[%s1] sm:$0xff]
  %v31 = vld [vmem:[%s1 + $0x1] sm:$0x3f]
  %v32 = vld [vmem:[%s0] sm:$0xff]
  %v33 = vld [vmem:[%s0 + $0x8] sm:$0xff]
  %v34 = vld [vmem:[%s0 + $0x10] sm:$0xff]
  %v35 = vld [vmem:[%s0 + $0x18] sm:$0xff]
  %v36 = vld [vmem:[%s0 + $0x20] sm:$0xf]
  %v37 = vld [vmem:[%s0 + $0x28] sm:$0xff]
  %v38 = vld [vmem:[%s0 + $0x30] sm:$0xff]
  %v39 = vld [vmem:[%s0 + $0x38] sm:$0xff]
  %v40 = vld [vmem:[%s0 + $0x40] sm:$0xff]
  %v41 = vld [vmem:[%s0 + $0x48] sm:$0xf]
  %v52 = vunpack.c.l.b16 %v32
  %v53 = vunpack.c.h.b16 %v32
  %v54 = vunpack.c.l.b16 %v33
  %v55 = vunpack.c.h.b16 %v33
  %v56 = vunpack.c.l.b16 %v34
  %v57 = vunpack.c.h.b16 %v34
  %v58 = vunpack.c.l.b16 %v35
  %v59 = vunpack.c.h.b16 %v35
  %v60 = vunpack.c.l.b16 %v36
  %v61 = vunpack.c.l.b16 %v37
  %v62 = vunpack.c.h.b16 %v37
  %v63 = vunpack.c.l.b16 %v38
  %v64 = vunpack.c.h.b16 %v38
  %v65 = vunpack.c.l.b16 %v39
  %v66 = vunpack.c.h.b16 %v39
  %v67 = vunpack.c.l.b16 %v40
  %v68 = vunpack.c.h.b16 %v40
  %v69 = vunpack.c.l.b16 %v41
  %v70 = vpack.c.b16 %v61, %v52
  %v71 = vpack.c.b16 %v62, %v53
  %v72 = vpack.c.b16 %v63, %v54
  %v73 = vpack.c.b16 %v64, %v55
  %v74 = vpack.c.b16 %v65, %v56
  %v75 = vpack.c.b16 %v66, %v57
  %v76 = vpack.c.b16 %v67, %v58
  %v77 = vpack.c.b16 %v68, %v59
  %v78 = vpack.c.b16 %v69, %v60
  %79 = vrot.lane.b32.xlu0 %v70, 19
  %v80 = vpop.permute.xlu0 %79
  %81 = vrot.lane.b32.xlu0 %v71, 19
  %v82 = vpop.permute.xlu0 %81
  %83 = vrot.lane.b32.xlu0 %v72, 19
  %v84 = vpop.permute.xlu0 %83
  %85 = vrot.lane.b32.xlu0 %v73, 19
  %v86 = vpop.permute.xlu0 %85
  %87 = vrot.lane.b32.xlu0 %v74, 19
  %v88 = vpop.permute.xlu0 %87
  %89 = vrot.lane.b32.xlu0 %v75, 19
  %v90 = vpop.permute.xlu0 %89
  %91 = vrot.lane.b32.xlu0 %v76, 19
  %v92 = vpop.permute.xlu0 %91
  %93 = vrot.lane.b32.xlu0 %v77, 19
  %v94 = vpop.permute.xlu0 %93
  %95 = vrot.lane.b32.xlu0 %v78, 19
  %v96 = vpop.permute.xlu0 %95
  %vm97 = vcmask 154624
  %v98 = vsel %vm97, %v80, %v82
  %v99 = vsel %vm97, %v82, %v84
  %v100 = vsel %vm97, %v84, %v86
  %v101 = vsel %vm97, %v86, %v88
  %v102 = vsel %vm97, %v88, %v90
  %v103 = vsel %vm97, %v90, %v92
  %v104 = vsel %vm97, %v92, %v94
  %v105 = vsel %vm97, %v94, %v96
  %114 = vst [vmem:[#allocation3] sm:$0xff] %v98
  %115 = vst [vmem:[#allocation3 + $0x8] sm:$0xff] %v99
  %116 = vst [vmem:[#allocation3 + $0x10] sm:$0xff] %v100
  %117 = vst [vmem:[#allocation3 + $0x18] sm:$0xff] %v101
  %118 = vst [vmem:[#allocation3 + $0x20] sm:$0xff] %v102
  %119 = vst [vmem:[#allocation3 + $0x28] sm:$0xff] %v103
  %120 = vst [vmem:[#allocation3 + $0x30] sm:$0xff] %v104
  %121 = vst [vmem:[#allocation3 + $0x38] sm:$0xff] %v105
  %v122 = vld [vmem:[%s0] sm:$0xff]
  %v123 = vld [vmem:[%s0 + $0x8] sm:$0xff]
  %v124 = vld [vmem:[%s0 + $0x10] sm:$0xff]
  %v125 = vld [vmem:[%s0 + $0x18] sm:$0xff]
  %v126 = vld [vmem:[%s0 + $0x20] sm:$0xf]
  %v127 = vld [vmem:[%s0 + $0x28] sm:$0xff]
  %v128 = vld [vmem:[%s0 + $0x30] sm:$0xff]
  %v129 = vld [vmem:[%s0 + $0x38] sm:$0xff]
  %v130 = vld [vmem:[%s0 + $0x40] sm:$0xff]
  %v131 = vld [vmem:[%s0 + $0x48] sm:$0xf]
  %v142 = vunpack.c.l.b16 %v122
  %v143 = vunpack.c.h.b16 %v122
  %v144 = vunpack.c.l.b16 %v123
  %v145 = vunpack.c.h.b16 %v123
  %v146 = vunpack.c.l.b16 %v124
  %v147 = vunpack.c.h.b16 %v124
  %v148 = vunpack.c.l.b16 %v125
  %v149 = vunpack.c.h.b16 %v125
  %v150 = vunpack.c.l.b16 %v126
  %v151 = vunpack.c.l.b16 %v127
  %v152 = vunpack.c.h.b16 %v127
  %v153 = vunpack.c.l.b16 %v128
  %v154 = vunpack.c.h.b16 %v128
  %v155 = vunpack.c.l.b16 %v129
  %v156 = vunpack.c.h.b16 %v129
  %v157 = vunpack.c.l.b16 %v130
  %v158 = vunpack.c.h.b16 %v130
  %v159 = vunpack.c.l.b16 %v131
  %v160 = vpack.c.b16 %v151, %v142
  %v161 = vpack.c.b16 %v152, %v143
  %v162 = vpack.c.b16 %v153, %v144
  %v163 = vpack.c.b16 %v154, %v145
  %v164 = vpack.c.b16 %v155, %v146
  %v165 = vpack.c.b16 %v156, %v147
  %v166 = vpack.c.b16 %v157, %v148
  %v167 = vpack.c.b16 %v158, %v149
  %v168 = vpack.c.b16 %v159, %v150
  %169 = vrot.lane.b32.xlu0 %v160, 18
  %v170 = vpop.permute.xlu0 %169
  %171 = vrot.lane.b32.xlu0 %v161, 18
  %v172 = vpop.permute.xlu0 %171
  %173 = vrot.lane.b32.xlu0 %v162, 18
  %v174 = vpop.permute.xlu0 %173
  %175 = vrot.lane.b32.xlu0 %v163, 18
  %v176 = vpop.permute.xlu0 %175
  %177 = vrot.lane.b32.xlu0 %v164, 18
  %v178 = vpop.permute.xlu0 %177
  %179 = vrot.lane.b32.xlu0 %v165, 18
  %v180 = vpop.permute.xlu0 %179
  %181 = vrot.lane.b32.xlu0 %v166, 18
  %v182 = vpop.permute.xlu0 %181
  %183 = vrot.lane.b32.xlu0 %v167, 18
  %v184 = vpop.permute.xlu0 %183
  %185 = vrot.lane.b32.xlu0 %v168, 18
  %v186 = vpop.permute.xlu0 %185
  %vm187 = vcmask 146432
  %v188 = vsel %vm187, %v170, %v172
  %v189 = vsel %vm187, %v172, %v174
  %v190 = vsel %vm187, %v174, %v176
  %v191 = vsel %vm187, %v176, %v178
  %v192 = vsel %vm187, %v178, %v180
  %v193 = vsel %vm187, %v180, %v182
  %v194 = vsel %vm187, %v182, %v184
  %v195 = vsel %vm187, %v184, %v186
  %204 = vst [vmem:[#allocation3 + $0x40] sm:$0xff] %v188
  %205 = vst [vmem:[#allocation3 + $0x48] sm:$0xff] %v189
  %206 = vst [vmem:[#allocation3 + $0x50] sm:$0xff] %v190
  %207 = vst [vmem:[#allocation3 + $0x58] sm:$0xff] %v191
  %208 = vst [vmem:[#allocation3 + $0x60] sm:$0xff] %v192
  %209 = vst [vmem:[#allocation3 + $0x68] sm:$0xff] %v193
  %210 = vst [vmem:[#allocation3 + $0x70] sm:$0xff] %v194
  %211 = vst [vmem:[#allocation3 + $0x78] sm:$0xff] %v195
  %v212 = vld [vmem:[%s0] sm:$0xff]
  %v213 = vld [vmem:[%s0 + $0x8] sm:$0xff]
  %v214 = vld [vmem:[%s0 + $0x10] sm:$0xff]
  %v215 = vld [vmem:[%s0 + $0x18] sm:$0xff]
  %v216 = vld [vmem:[%s0 + $0x20] sm:$0xf]
  %v217 = vld [vmem:[%s0 + $0x28] sm:$0xff]
  %v218 = vld [vmem:[%s0 + $0x30] sm:$0xff]
  %v219 = vld [vmem:[%s0 + $0x38] sm:$0xff]
  %v220 = vld [vmem:[%s0 + $0x40] sm:$0xff]
  %v221 = vld [vmem:[%s0 + $0x48] sm:$0xf]
  %v232 = vunpack.c.l.b16 %v212
  %v233 = vunpack.c.h.b16 %v212
  %v234 = vunpack.c.l.b16 %v213
  %v235 = vunpack.c.h.b16 %v213
  %v236 = vunpack.c.l.b16 %v214
  %v237 = vunpack.c.h.b16 %v214
  %v238 = vunpack.c.l.b16 %v215
  %v239 = vunpack.c.h.b16 %v215
  %v240 = vunpack.c.l.b16 %v216
  %v241 = vunpack.c.l.b16 %v217
  %v242 = vunpack.c.h.b16 %v217
  %v243 = vunpack.c.l.b16 %v218
  %v244 = vunpack.c.h.b16 %v218
  %v245 = vunpack.c.l.b16 %v219
  %v246 = vunpack.c.h.b16 %v219
  %v247 = vunpack.c.l.b16 %v220
  %v248 = vunpack.c.h.b16 %v220
  %v249 = vunpack.c.l.b16 %v221
  %v250 = vpack.c.b16 %v241, %v232
  %v251 = vpack.c.b16 %v242, %v233
  %v252 = vpack.c.b16 %v243, %v234
  %v253 = vpack.c.b16 %v244, %v235
  %v254 = vpack.c.b16 %v245, %v236
  %v255 = vpack.c.b16 %v246, %v237
  %v256 = vpack.c.b16 %v247, %v238
  %v257 = vpack.c.b16 %v248, %v239
  %v258 = vpack.c.b16 %v249, %v240
  %259 = vrot.lane.b32.xlu0 %v250, 17
  %v260 = vpop.permute.xlu0 %259
  %261 = vrot.lane.b32.xlu0 %v251, 17
  %v262 = vpop.permute.xlu0 %261
  %263 = vrot.lane.b32.xlu0 %v252, 17
  %v264 = vpop.permute.xlu0 %263
  %265 = vrot.lane.b32.xlu0 %v253, 17
  %v266 = vpop.permute.xlu0 %265
  %267 = vrot.lane.b32.xlu0 %v254, 17
  %v268 = vpop.permute.xlu0 %267
  %269 = vrot.lane.b32.xlu0 %v255, 17
  %v270 = vpop.permute.xlu0 %269
  %271 = vrot.lane.b32.xlu0 %v256, 17
  %v272 = vpop.permute.xlu0 %271
  %273 = vrot.lane.b32.xlu0 %v257, 17
  %v274 = vpop.permute.xlu0 %273
  %275 = vrot.lane.b32.xlu0 %v258, 17
  %v276 = vpop.permute.xlu0 %275
  %vm277 = vcmask 138240
  %v278 = vsel %vm277, %v260, %v262
  %v279 = vsel %vm277, %v262, %v264
  %v280 = vsel %vm277, %v264, %v266
  %v281 = vsel %vm277, %v266, %v268
  %v282 = vsel %vm277, %v268, %v270
  %v283 = vsel %vm277, %v270, %v272
  %v284 = vsel %vm277, %v272, %v274
  %v285 = vsel %vm277, %v274, %v276
  %294 = vst [vmem:[#allocation3 + $0x80] sm:$0xff] %v278
  %295 = vst [vmem:[#allocation3 + $0x88] sm:$0xff] %v279
  %296 = vst [vmem:[#allocation3 + $0x90] sm:$0xff] %v280
  %297 = vst [vmem:[#allocation3 + $0x98] sm:$0xff] %v281
  %298 = vst [vmem:[#allocation3 + $0xa0] sm:$0xff] %v282
  %299 = vst [vmem:[#allocation3 + $0xa8] sm:$0xff] %v283
  %300 = vst [vmem:[#allocation3 + $0xb0] sm:$0xff] %v284
  %301 = vst [vmem:[#allocation3 + $0xb8] sm:$0xff] %v285
  %v302 = vld [vmem:[%s0] sm:$0xff]
  %v303 = vld [vmem:[%s0 + $0x8] sm:$0xff]
  %v304 = vld [vmem:[%s0 + $0x10] sm:$0xff]
  %v305 = vld [vmem:[%s0 + $0x18] sm:$0xff]
  %v306 = vld [vmem:[%s0 + $0x20] sm:$0xf]
  %v307 = vld [vmem:[%s0 + $0x28] sm:$0xff]
  %v308 = vld [vmem:[%s0 + $0x30] sm:$0xff]
  %v309 = vld [vmem:[%s0 + $0x38] sm:$0xff]
  %v310 = vld [vmem:[%s0 + $0x40] sm:$0xff]
  %v311 = vld [vmem:[%s0 + $0x48] sm:$0xf]
  %v322 = vunpack.c.l.b16 %v302
  %v323 = vunpack.c.h.b16 %v302
  %v324 = vunpack.c.l.b16 %v303
  %v325 = vunpack.c.h.b16 %v303
  %v326 = vunpack.c.l.b16 %v304
  %v327 = vunpack.c.h.b16 %v304
  %v328 = vunpack.c.l.b16 %v305
  %v329 = vunpack.c.h.b16 %v305
  %v330 = vunpack.c.l.b16 %v306
  %v331 = vunpack.c.l.b16 %v307
  %v332 = vunpack.c.h.b16 %v307
  %v333 = vunpack.c.l.b16 %v308
  %v334 = vunpack.c.h.b16 %v308
  %v335 = vunpack.c.l.b16 %v309
  %v336 = vunpack.c.h.b16 %v309
  %v337 = vunpack.c.l.b16 %v310
  %v338 = vunpack.c.h.b16 %v310
  %v339 = vunpack.c.l.b16 %v311
  %v340 = vpack.c.b16 %v331, %v322
  %v341 = vpack.c.b16 %v332, %v323
  %v342 = vpack.c.b16 %v333, %v324
  %v343 = vpack.c.b16 %v334, %v325
  %v344 = vpack.c.b16 %v335, %v326
  %v345 = vpack.c.b16 %v336, %v327
  %v346 = vpack.c.b16 %v337, %v328
  %v347 = vpack.c.b16 %v338, %v329
  %v348 = vpack.c.b16 %v339, %v330
  %349 = vrot.lane.b32.xlu0 %v340, 1
  %v350 = vpop.permute.xlu0 %349
  %351 = vrot.lane.b32.xlu0 %v341, 1
  %v352 = vpop.permute.xlu0 %351
  %353 = vrot.lane.b32.xlu0 %v342, 1
  %v354 = vpop.permute.xlu0 %353
  %355 = vrot.lane.b32.xlu0 %v343, 1
  %v356 = vpop.permute.xlu0 %355
  %357 = vrot.lane.b32.xlu0 %v344, 1
  %v358 = vpop.permute.xlu0 %357
  %359 = vrot.lane.b32.xlu0 %v345, 1
  %v360 = vpop.permute.xlu0 %359
  %361 = vrot.lane.b32.xlu0 %v346, 1
  %v362 = vpop.permute.xlu0 %361
  %363 = vrot.lane.b32.xlu0 %v347, 1
  %v364 = vpop.permute.xlu0 %363
  %365 = vrot.lane.b32.xlu0 %v348, 1
  %v366 = vpop.permute.xlu0 %365
  %vm367 = vcmask 7168
  %v368 = vsel %vm367, %v350, %v352
  %v369 = vsel %vm367, %v352, %v354
  %v370 = vsel %vm367, %v354, %v356
  %v371 = vsel %vm367, %v356, %v358
  %v372 = vsel %vm367, %v358, %v360
  %v373 = vsel %vm367, %v360, %v362
  %v374 = vsel %vm367, %v362, %v364
  %v375 = vsel %vm367, %v364, %v366
  %384 = vst [vmem:[#allocation3 + $0xc0] sm:$0xff] %v368
  %385 = vst [vmem:[#allocation3 + $0xc8] sm:$0xff] %v369
  %386 = vst [vmem:[#allocation3 + $0xd0] sm:$0xff] %v370
  %387 = vst [vmem:[#allocation3 + $0xd8] sm:$0xff] %v371
  %388 = vst [vmem:[#allocation3 + $0xe0] sm:$0xff] %v372
  %389 = vst [vmem:[#allocation3 + $0xe8] sm:$0xff] %v373
  %390 = vst [vmem:[#allocation3 + $0xf0] sm:$0xff] %v374
  %391 = vst [vmem:[#allocation3 + $0xf8] sm:$0xff] %v375
  %v392 = vld [vmem:[%s0 + $0x4] sm:$0xff]
  %v393 = vld [vmem:[%s0 + $0xc] sm:$0xff]
  %v394 = vld [vmem:[%s0 + $0x14] sm:$0xff]
  %v395 = vld [vmem:[%s0 + $0x1c] sm:$0xff]
  %v396 = vld [vmem:[%s0 + $0x2c] sm:$0xff]
  %v397 = vld [vmem:[%s0 + $0x34] sm:$0xff]
  %v398 = vld [vmem:[%s0 + $0x3c] sm:$0xff]
  %v399 = vld [vmem:[%s0 + $0x44] sm:$0xff]
  %v408 = vunpack.c.l.b16 %v392
  %v409 = vunpack.c.h.b16 %v392
  %v410 = vunpack.c.l.b16 %v393
  %v411 = vunpack.c.h.b16 %v393
  %v412 = vunpack.c.l.b16 %v394
  %v413 = vunpack.c.h.b16 %v394
  %v414 = vunpack.c.l.b16 %v395
  %v415 = vunpack.c.h.b16 %v395
  %v416 = vunpack.c.l.b16 %v396
  %v417 = vunpack.c.h.b16 %v396
  %v418 = vunpack.c.l.b16 %v397
  %v419 = vunpack.c.h.b16 %v397
  %v420 = vunpack.c.l.b16 %v398
  %v421 = vunpack.c.h.b16 %v398
  %v422 = vunpack.c.l.b16 %v399
  %v423 = vunpack.c.h.b16 %v399
  %v424 = vpack.c.b16 %v416, %v408
  %v425 = vpack.c.b16 %v417, %v409
  %v426 = vpack.c.b16 %v418, %v410
  %v427 = vpack.c.b16 %v419, %v411
  %v428 = vpack.c.b16 %v420, %v412
  %v429 = vpack.c.b16 %v421, %v413
  %v430 = vpack.c.b16 %v422, %v414
  %v431 = vpack.c.b16 %v423, %v415
  %440 = vst [vmem:[#allocation3 + $0x100] sm:$0xff] %v424
  %441 = vst [vmem:[#allocation3 + $0x108] sm:$0xff] %v425
  %442 = vst [vmem:[#allocation3 + $0x110] sm:$0xff] %v426
  %443 = vst [vmem:[#allocation3 + $0x118] sm:$0xff] %v427
  %444 = vst [vmem:[#allocation3 + $0x120] sm:$0xff] %v428
  %445 = vst [vmem:[#allocation3 + $0x128] sm:$0xff] %v429
  %446 = vst [vmem:[#allocation3 + $0x130] sm:$0xff] %v430
  %447 = vst [vmem:[#allocation3 + $0x138] sm:$0xff] %v431
  %v448 = vld [vmem:[%s0 + $0x4] sm:$0xff]
  %v449 = vld [vmem:[%s0 + $0xc] sm:$0xff]
  %v450 = vld [vmem:[%s0 + $0x14] sm:$0xff]
  %v451 = vld [vmem:[%s0 + $0x1c] sm:$0xff]
  %v452 = vld [vmem:[%s0 + $0x24] sm:$0xf]
  %v453 = vld [vmem:[%s0 + $0x2c] sm:$0xff]
  %v454 = vld [vmem:[%s0 + $0x34] sm:$0xff]
  %v455 = vld [vmem:[%s0 + $0x3c] sm:$0xff]
  %v456 = vld [vmem:[%s0 + $0x44] sm:$0xff]
  %v457 = vld [vmem:[%s0 + $0x4c] sm:$0xf]
  %v468 = vunpack.c.l.b16 %v448
  %v469 = vunpack.c.h.b16 %v448
  %v470 = vunpack.c.l.b16 %v449
  %v471 = vunpack.c.h.b16 %v449
  %v472 = vunpack.c.l.b16 %v450
  %v473 = vunpack.c.h.b16 %v450
  %v474 = vunpack.c.l.b16 %v451
  %v475 = vunpack.c.h.b16 %v451
  %v476 = vunpack.c.l.b16 %v452
  %v477 = vunpack.c.l.b16 %v453
  %v478 = vunpack.c.h.b16 %v453
  %v479 = vunpack.c.l.b16 %v454
  %v480 = vunpack.c.h.b16 %v454
  %v481 = vunpack.c.l.b16 %v455
  %v482 = vunpack.c.h.b16 %v455
  %v483 = vunpack.c.l.b16 %v456
  %v484 = vunpack.c.h.b16 %v456
  %v485 = vunpack.c.l.b16 %v457
  %v486 = vpack.c.b16 %v477, %v468
  %v487 = vpack.c.b16 %v478, %v469
  %v488 = vpack.c.b16 %v479, %v470
  %v489 = vpack.c.b16 %v480, %v471
  %v490 = vpack.c.b16 %v481, %v472
  %v491 = vpack.c.b16 %v482, %v473
  %v492 = vpack.c.b16 %v483, %v474
  %v493 = vpack.c.b16 %v484, %v475
  %v494 = vpack.c.b16 %v485, %v476
  %495 = vrot.lane.b32.xlu0 %v486, 127
  %v496 = vpop.permute.xlu0 %495
  %497 = vrot.lane.b32.xlu0 %v487, 127
  %v498 = vpop.permute.xlu0 %497
  %499 = vrot.lane.b32.xlu0 %v488, 127
  %v500 = vpop.permute.xlu0 %499
  %501 = vrot.lane.b32.xlu0 %v489, 127
  %v502 = vpop.permute.xlu0 %501
  %503 = vrot.lane.b32.xlu0 %v490, 127
  %v504 = vpop.permute.xlu0 %503
  %505 = vrot.lane.b32.xlu0 %v491, 127
  %v506 = vpop.permute.xlu0 %505
  %507 = vrot.lane.b32.xlu0 %v492, 127
  %v508 = vpop.permute.xlu0 %507
  %509 = vrot.lane.b32.xlu0 %v493, 127
  %v510 = vpop.permute.xlu0 %509
  %511 = vrot.lane.b32.xlu0 %v494, 127
  %v512 = vpop.permute.xlu0 %511
  %vm513 = vcmask 1039360
  %v514 = vsel %vm513, %v496, %v498
  %v515 = vsel %vm513, %v498, %v500
  %v516 = vsel %vm513, %v500, %v502
  %v517 = vsel %vm513, %v502, %v504
  %v518 = vsel %vm513, %v504, %v506
  %v519 = vsel %vm513, %v506, %v508
  %v520 = vsel %vm513, %v508, %v510
  %v521 = vsel %vm513, %v510, %v512
  %530 = vst [vmem:[#allocation3 + $0x140] sm:$0xff] %v514
  %531 = vst [vmem:[#allocation3 + $0x148] sm:$0xff] %v515
  %532 = vst [vmem:[#allocation3 + $0x150] sm:$0xff] %v516
  %533 = vst [vmem:[#allocation3 + $0x158] sm:$0xff] %v517
  %534 = vst [vmem:[#allocation3 + $0x160] sm:$0xff] %v518
  %535 = vst [vmem:[#allocation3 + $0x168] sm:$0xff] %v519
  %536 = vst [vmem:[#allocation3 + $0x170] sm:$0xff] %v520
  %537 = vst [vmem:[#allocation3 + $0x178] sm:$0xff] %v521
  %v538 = vld [vmem:[%s0 + $0x4] sm:$0xff]
  %v539 = vld [vmem:[%s0 + $0xc] sm:$0xff]
  %v540 = vld [vmem:[%s0 + $0x14] sm:$0xff]
  %v541 = vld [vmem:[%s0 + $0x1c] sm:$0xff]
  %v542 = vld [vmem:[%s0 + $0x24] sm:$0xf]
  %v543 = vld [vmem:[%s0 + $0x2c] sm:$0xff]
  %v544 = vld [vmem:[%s0 + $0x34] sm:$0xff]
  %v545 = vld [vmem:[%s0 + $0x3c] sm:$0xff]
  %v546 = vld [vmem:[%s0 + $0x44] sm:$0xff]
  %v547 = vld [vmem:[%s0 + $0x4c] sm:$0xf]
  %v558 = vunpack.c.l.b16 %v538
  %v559 = vunpack.c.h.b16 %v538
  %v560 = vunpack.c.l.b16 %v539
  %v561 = vunpack.c.h.b16 %v539
  %v562 = vunpack.c.l.b16 %v540
  %v563 = vunpack.c.h.b16 %v540
  %v564 = vunpack.c.l.b16 %v541
  %v565 = vunpack.c.h.b16 %v541
  %v566 = vunpack.c.l.b16 %v542
  %v567 = vunpack.c.l.b16 %v543
  %v568 = vunpack.c.h.b16 %v543
  %v569 = vunpack.c.l.b16 %v544
  %v570 = vunpack.c.h.b16 %v544
  %v571 = vunpack.c.l.b16 %v545
  %v572 = vunpack.c.h.b16 %v545
  %v573 = vunpack.c.l.b16 %v546
  %v574 = vunpack.c.h.b16 %v546
  %v575 = vunpack.c.l.b16 %v547
  %v576 = vpack.c.b16 %v567, %v558
  %v577 = vpack.c.b16 %v568, %v559
  %v578 = vpack.c.b16 %v569, %v560
  %v579 = vpack.c.b16 %v570, %v561
  %v580 = vpack.c.b16 %v571, %v562
  %v581 = vpack.c.b16 %v572, %v563
  %v582 = vpack.c.b16 %v573, %v564
  %v583 = vpack.c.b16 %v574, %v565
  %v584 = vpack.c.b16 %v575, %v566
  %585 = vrot.lane.b32.xlu0 %v576, 111
  %v586 = vpop.permute.xlu0 %585
  %587 = vrot.lane.b32.xlu0 %v577, 111
  %v588 = vpop.permute.xlu0 %587
  %589 = vrot.lane.b32.xlu0 %v578, 111
  %v590 = vpop.permute.xlu0 %589
  %591 = vrot.lane.b32.xlu0 %v579, 111
  %v592 = vpop.permute.xlu0 %591
  %593 = vrot.lane.b32.xlu0 %v580, 111
  %v594 = vpop.permute.xlu0 %593
  %595 = vrot.lane.b32.xlu0 %v581, 111
  %v596 = vpop.permute.xlu0 %595
  %597 = vrot.lane.b32.xlu0 %v582, 111
  %v598 = vpop.permute.xlu0 %597
  %599 = vrot.lane.b32.xlu0 %v583, 111
  %v600 = vpop.permute.xlu0 %599
  %601 = vrot.lane.b32.xlu0 %v584, 111
  %v602 = vpop.permute.xlu0 %601
  %vm603 = vcmask 908288
  %v604 = vsel %vm603, %v586, %v588
  %v605 = vsel %vm603, %v588, %v590
  %v606 = vsel %vm603, %v590, %v592
  %v607 = vsel %vm603, %v592, %v594
  %v608 = vsel %vm603, %v594, %v596
  %v609 = vsel %vm603, %v596, %v598
  %v610 = vsel %vm603, %v598, %v600
  %v611 = vsel %vm603, %v600, %v602
  %620 = vst [vmem:[#allocation3 + $0x180] sm:$0xff] %v604
  %621 = vst [vmem:[#allocation3 + $0x188] sm:$0xff] %v605
  %622 = vst [vmem:[#allocation3 + $0x190] sm:$0xff] %v606
  %623 = vst [vmem:[#allocation3 + $0x198] sm:$0xff] %v607
  %624 = vst [vmem:[#allocation3 + $0x1a0] sm:$0xff] %v608
  %625 = vst [vmem:[#allocation3 + $0x1a8] sm:$0xff] %v609
  %626 = vst [vmem:[#allocation3 + $0x1b0] sm:$0xff] %v610
  %627 = vst [vmem:[#allocation3 + $0x1b8] sm:$0xff] %v611
  %v628 = vld [vmem:[%s0 + $0x4] sm:$0xff]
  %v629 = vld [vmem:[%s0 + $0xc] sm:$0xff]
  %v630 = vld [vmem:[%s0 + $0x14] sm:$0xff]
  %v631 = vld [vmem:[%s0 + $0x1c] sm:$0xff]
  %v632 = vld [vmem:[%s0 + $0x24] sm:$0xf]
  %v633 = vld [vmem:[%s0 + $0x2c] sm:$0xff]
  %v634 = vld [vmem:[%s0 + $0x34] sm:$0xff]
  %v635 = vld [vmem:[%s0 + $0x3c] sm:$0xff]
  %v636 = vld [vmem:[%s0 + $0x44] sm:$0xff]
  %v637 = vld [vmem:[%s0 + $0x4c] sm:$0xf]
  %v648 = vunpack.c.l.b16 %v628
  %v649 = vunpack.c.h.b16 %v628
  %v650 = vunpack.c.l.b16 %v629
  %v651 = vunpack.c.h.b16 %v629
  %v652 = vunpack.c.l.b16 %v630
  %v653 = vunpack.c.h.b16 %v630
  %v654 = vunpack.c.l.b16 %v631
  %v655 = vunpack.c.h.b16 %v631
  %v656 = vunpack.c.l.b16 %v632
  %v657 = vunpack.c.l.b16 %v633
  %v658 = vunpack.c.h.b16 %v633
  %v659 = vunpack.c.l.b16 %v634
  %v660 = vunpack.c.h.b16 %v634
  %v661 = vunpack.c.l.b16 %v635
  %v662 = vunpack.c.h.b16 %v635
  %v663 = vunpack.c.l.b16 %v636
  %v664 = vunpack.c.h.b16 %v636
  %v665 = vunpack.c.l.b16 %v637
  %v666 = vpack.c.b16 %v657, %v648
  %v667 = vpack.c.b16 %v658, %v649
  %v668 = vpack.c.b16 %v659, %v650
  %v669 = vpack.c.b16 %v660, %v651
  %v670 = vpack.c.b16 %v661, %v652
  %v671 = vpack.c.b16 %v662, %v653
  %v672 = vpack.c.b16 %v663, %v654
  %v673 = vpack.c.b16 %v664, %v655
  %v674 = vpack.c.b16 %v665, %v656
  %675 = vrot.lane.b32.xlu0 %v666, 110
  %v676 = vpop.permute.xlu0 %675
  %677 = vrot.lane.b32.xlu0 %v667, 110
  %v678 = vpop.permute.xlu0 %677
  %679 = vrot.lane.b32.xlu0 %v668, 110
  %v680 = vpop.permute.xlu0 %679
  %681 = vrot.lane.b32.xlu0 %v669, 110
  %v682 = vpop.permute.xlu0 %681
  %683 = vrot.lane.b32.xlu0 %v670, 110
  %v684 = vpop.permute.xlu0 %683
  %685 = vrot.lane.b32.xlu0 %v671, 110
  %v686 = vpop.permute.xlu0 %685
  %687 = vrot.lane.b32.xlu0 %v672, 110
  %v688 = vpop.permute.xlu0 %687
  %689 = vrot.lane.b32.xlu0 %v673, 110
  %v690 = vpop.permute.xlu0 %689
  %691 = vrot.lane.b32.xlu0 %v674, 110
  %v692 = vpop.permute.xlu0 %691
  %vm693 = vcmask 900096
  %v694 = vsel %vm693, %v676, %v678
  %v695 = vsel %vm693, %v678, %v680
  %v696 = vsel %vm693, %v680, %v682
  %v697 = vsel %vm693, %v682, %v684
  %v698 = vsel %vm693, %v684, %v686
  %v699 = vsel %vm693, %v686, %v688
  %v700 = vsel %vm693, %v688, %v690
  %v701 = vsel %vm693, %v690, %v692
  %710 = vst [vmem:[#allocation3 + $0x1c0] sm:$0xff] %v694
  %711 = vst [vmem:[#allocation3 + $0x1c8] sm:$0xff] %v695
  %712 = vst [vmem:[#allocation3 + $0x1d0] sm:$0xff] %v696
  %713 = vst [vmem:[#allocation3 + $0x1d8] sm:$0xff] %v697
  %714 = vst [vmem:[#allocation3 + $0x1e0] sm:$0xff] %v698
  %715 = vst [vmem:[#allocation3 + $0x1e8] sm:$0xff] %v699
  %716 = vst [vmem:[#allocation3 + $0x1f0] sm:$0xff] %v700
  %717 = vst [vmem:[#allocation3 + $0x1f8] sm:$0xff] %v701
  %v718 = vld [vmem:[%s0 + $0x4] sm:$0xff]
  %v719 = vld [vmem:[%s0 + $0xc] sm:$0xff]
  %v720 = vld [vmem:[%s0 + $0x14] sm:$0xff]
  %v721 = vld [vmem:[%s0 + $0x1c] sm:$0xff]
  %v722 = vld [vmem:[%s0 + $0x24] sm:$0xf]
  %v723 = vld [vmem:[%s0 + $0x2c] sm:$0xff]
  %v724 = vld [vmem:[%s0 + $0x34] sm:$0xff]
  %v725 = vld [vmem:[%s0 + $0x3c] sm:$0xff]
  %v726 = vld [vmem:[%s0 + $0x44] sm:$0xff]
  %v727 = vld [vmem:[%s0 + $0x4c] sm:$0xf]
  %v738 = vunpack.c.l.b16 %v718
  %v739 = vunpack.c.h.b16 %v718
  %v740 = vunpack.c.l.b16 %v719
  %v741 = vunpack.c.h.b16 %v719
  %v742 = vunpack.c.l.b16 %v720
  %v743 = vunpack.c.h.b16 %v720
  %v744 = vunpack.c.l.b16 %v721
  %v745 = vunpack.c.h.b16 %v721
  %v746 = vunpack.c.l.b16 %v722
  %v747 = vunpack.c.l.b16 %v723
  %v748 = vunpack.c.h.b16 %v723
  %v749 = vunpack.c.l.b16 %v724
  %v750 = vunpack.c.h.b16 %v724
  %v751 = vunpack.c.l.b16 %v725
  %v752 = vunpack.c.h.b16 %v725
  %v753 = vunpack.c.l.b16 %v726
  %v754 = vunpack.c.h.b16 %v726
  %v755 = vunpack.c.l.b16 %v727
  %v756 = vpack.c.b16 %v747, %v738
  %v757 = vpack.c.b16 %v748, %v739
  %v758 = vpack.c.b16 %v749, %v740
  %v759 = vpack.c.b16 %v750, %v741
  %v760 = vpack.c.b16 %v751, %v742
  %v761 = vpack.c.b16 %v752, %v743
  %v762 = vpack.c.b16 %v753, %v744
  %v763 = vpack.c.b16 %v754, %v745
  %v764 = vpack.c.b16 %v755, %v746
  %765 = vrot.lane.b32.xlu0 %v756, 109
  %v766 = vpop.permute.xlu0 %765
  %767 = vrot.lane.b32.xlu0 %v757, 109
  %v768 = vpop.permute.xlu0 %767
  %769 = vrot.lane.b32.xlu0 %v758, 109
  %v770 = vpop.permute.xlu0 %769
  %771 = vrot.lane.b32.xlu0 %v759, 109
  %v772 = vpop.permute.xlu0 %771
  %773 = vrot.lane.b32.xlu0 %v760, 109
  %v774 = vpop.permute.xlu0 %773
  %775 = vrot.lane.b32.xlu0 %v761, 109
  %v776 = vpop.permute.xlu0 %775
  %777 = vrot.lane.b32.xlu0 %v762, 109
  %v778 = vpop.permute.xlu0 %777
  %779 = vrot.lane.b32.xlu0 %v763, 109
  %v780 = vpop.permute.xlu0 %779
  %781 = vrot.lane.b32.xlu0 %v764, 109
  %v782 = vpop.permute.xlu0 %781
  %vm783 = vcmask 891904
  %v784 = vsel %vm783, %v766, %v768
  %v785 = vsel %vm783, %v768, %v770
  %v786 = vsel %vm783, %v770, %v772
  %v787 = vsel %vm783, %v772, %v774
  %v788 = vsel %vm783, %v774, %v776
  %v789 = vsel %vm783, %v776, %v778
  %v790 = vsel %vm783, %v778, %v780
  %v791 = vsel %vm783, %v780, %v782
  %800 = vst [vmem:[#allocation3 + $0x200] sm:$0xff] %v784
  %801 = vst [vmem:[#allocation3 + $0x208] sm:$0xff] %v785
  %802 = vst [vmem:[#allocation3 + $0x210] sm:$0xff] %v786
  %803 = vst [vmem:[#allocation3 + $0x218] sm:$0xff] %v787
  %804 = vst [vmem:[#allocation3 + $0x220] sm:$0xff] %v788
  %805 = vst [vmem:[#allocation3 + $0x228] sm:$0xff] %v789
  %806 = vst [vmem:[#allocation3 + $0x230] sm:$0xff] %v790
  %807 = vst [vmem:[#allocation3 + $0x238] sm:$0xff] %v791
  %v808 = vld [vmem:[%s2] sm:$0xff]
  %v809 = vld [vmem:[%s2 + $0x8] sm:$0xff]
  %v810 = vld [vmem:[#allocation3] sm:$0xff]
  %v811 = vld [vmem:[#allocation3 + $0x8] sm:$0xff]
  %v812 = vld [vmem:[#allocation3 + $0x10] sm:$0xff]
  %v813 = vld [vmem:[#allocation3 + $0x18] sm:$0xff]
  %v814 = vld [vmem:[#allocation3 + $0x20] sm:$0xff]
  %v815 = vld [vmem:[#allocation3 + $0x28] sm:$0xff]
  %v816 = vld [vmem:[#allocation3 + $0x30] sm:$0xff]
  %v817 = vld [vmem:[#allocation3 + $0x38] sm:$0xff]
  %v818 = vld [vmem:[#allocation3 + $0x40] sm:$0xff]
  %v819 = vld [vmem:[#allocation3 + $0x48] sm:$0xff]
  %v820 = vld [vmem:[#allocation3 + $0x50] sm:$0xff]
  %v821 = vld [vmem:[#allocation3 + $0x58] sm:$0xff]
  %v822 = vld [vmem:[#allocation3 + $0x60] sm:$0xff]
  %v823 = vld [vmem:[#allocation3 + $0x68] sm:$0xff]
  %v824 = vld [vmem:[#allocation3 + $0x70] sm:$0xff]
  %v825 = vld [vmem:[#allocation3 + $0x78] sm:$0xff]
  %v826 = vld [vmem:[#allocation3 + $0x80] sm:$0xff]
  %v827 = vld [vmem:[#allocation3 + $0x88] sm:$0xff]
  %v828 = vld [vmem:[#allocation3 + $0x90] sm:$0xff]
  %v829 = vld [vmem:[#allocation3 + $0x98] sm:$0xff]
  %v830 = vld [vmem:[#allocation3 + $0xa0] sm:$0xff]
  %v831 = vld [vmem:[#allocation3 + $0xa8] sm:$0xff]
  %v832 = vld [vmem:[#allocation3 + $0xb0] sm:$0xff]
  %v833 = vld [vmem:[#allocation3 + $0xb8] sm:$0xff]
  %v834 = vld [vmem:[#allocation3 + $0xc0] sm:$0xff]
  %v835 = vld [vmem:[#allocation3 + $0xc8] sm:$0xff]
  %v836 = vld [vmem:[#allocation3 + $0xd0] sm:$0xff]
  %v837 = vld [vmem:[#allocation3 + $0xd8] sm:$0xff]
  %v838 = vld [vmem:[#allocation3 + $0xe0] sm:$0xff]
  %v839 = vld [vmem:[#allocation3 + $0xe8] sm:$0xff]
  %v840 = vld [vmem:[#allocation3 + $0xf0] sm:$0xff]
  %v841 = vld [vmem:[#allocation3 + $0xf8] sm:$0xff]
  %v842 = vld [vmem:[#allocation3 + $0x100] sm:$0xff]
  %v843 = vld [vmem:[#allocation3 + $0x108] sm:$0xff]
  %v844 = vld [vmem:[#allocation3 + $0x110] sm:$0xff]
  %v845 = vld [vmem:[#allocation3 + $0x118] sm:$0xff]
  %v846 = vld [vmem:[#allocation3 + $0x120] sm:$0xff]
  %v847 = vld [vmem:[#allocation3 + $0x128] sm:$0xff]
  %v848 = vld [vmem:[#allocation3 + $0x130] sm:$0xff]
  %v849 = vld [vmem:[#allocation3 + $0x138] sm:$0xff]
  %v850 = vld [vmem:[#allocation3 + $0x140] sm:$0xff]
  %v851 = vld [vmem:[#allocation3 + $0x148] sm:$0xff]
  %v852 = vld [vmem:[#allocation3 + $0x150] sm:$0xff]
  %v853 = vld [vmem:[#allocation3 + $0x158] sm:$0xff]
  %v854 = vld [vmem:[#allocation3 + $0x160] sm:$0xff]
  %v855 = vld [vmem:[#allocation3 + $0x168] sm:$0xff]
  %v856 = vld [vmem:[#allocation3 + $0x170] sm:$0xff]
  %v857 = vld [vmem:[#allocation3 + $0x178] sm:$0xff]
  %v858 = vld [vmem:[#allocation3 + $0x180] sm:$0xff]
  %v859 = vld [vmem:[#allocation3 + $0x188] sm:$0xff]
  %v860 = vld [vmem:[#allocation3 + $0x190] sm:$0xff]
  %v861 = vld [vmem:[#allocation3 + $0x198] sm:$0xff]
  %v862 = vld [vmem:[#allocation3 + $0x1a0] sm:$0xff]
  %v863 = vld [vmem:[#allocation3 + $0x1a8] sm:$0xff]
  %v864 = vld [vmem:[#allocation3 + $0x1b0] sm:$0xff]
  %v865 = vld [vmem:[#allocation3 + $0x1b8] sm:$0xff]
  %v866 = vld [vmem:[#allocation3 + $0x1c0] sm:$0xff]
  %v867 = vld [vmem:[#allocation3 + $0x1c8] sm:$0xff]
  %v868 = vld [vmem:[#allocation3 + $0x1d0] sm:$0xff]
  %v869 = vld [vmem:[#allocation3 + $0x1d8] sm:$0xff]
  %v870 = vld [vmem:[#allocation3 + $0x1e0] sm:$0xff]
  %v871 = vld [vmem:[#allocation3 + $0x1e8] sm:$0xff]
  %v872 = vld [vmem:[#allocation3 + $0x1f0] sm:$0xff]
  %v873 = vld [vmem:[#allocation3 + $0x1f8] sm:$0xff]
  %v874 = vld [vmem:[#allocation3 + $0x200] sm:$0xff]
  %v875 = vld [vmem:[#allocation3 + $0x208] sm:$0xff]
  %v876 = vld [vmem:[#allocation3 + $0x210] sm:$0xff]
  %v877 = vld [vmem:[#allocation3 + $0x218] sm:$0xff]
  %v878 = vld [vmem:[#allocation3 + $0x220] sm:$0xff]
  %v879 = vld [vmem:[#allocation3 + $0x228] sm:$0xff]
  %v880 = vld [vmem:[#allocation3 + $0x230] sm:$0xff]
  %v881 = vld [vmem:[#allocation3 + $0x238] sm:$0xff]
  %v884 = vunpack.c.l.b16 %v808
  %v885 = vunpack.c.h.b16 %v808
  %v886 = vunpack.c.l.b16 %v809
  %v887 = vunpack.c.h.b16 %v809
  %v888 = vpack.c.b16 %v886, %v884
  %v889 = vpack.c.b16 %v887, %v885
  %vm891 = vcmask 130048
  %v893 = vsel %vm891, %v889, 0
  %895 = vmatprep.subr.bf16.mxu0 %v811
  %896 = vmatpush1.bf16.msra.mxu0 %v810
  %897 = vmatprep.subr.bf16.mxu0 %v819
  %898 = vmatpush1.bf16.msra.mxu0 %v818
  %899 = vmatprep.subr.bf16.mxu0 %v827
  %900 = vmatpush1.bf16.msra.mxu0 %v826
  %901 = vmatprep.subr.bf16.mxu0 %v835
  %902 = vmatpush1.bf16.msra.mxu0 %v834
  %903 = vmatprep.subr.bf16.mxu0 %v843
  %904 = vmatpush1.bf16.msra.mxu0 %v842
  %905 = vmatprep.subr.bf16.mxu0 %v851
  %906 = vmatpush1.bf16.msra.mxu0 %v850
  %907 = vmatprep.subr.bf16.mxu0 %v859
  %908 = vmatpush1.bf16.msra.mxu0 %v858
  %909 = vmatprep.subr.bf16.mxu0 %v867
  %910 = vmatpush1.bf16.msra.mxu0 %v866
  %911 = vmatprep.subr.bf16.mxu0 %v875
  %912 = vmatpush1.bf16.msra.mxu0 %v874
  %913 = vmatprep.subr.bf16.mxu0 0
  %914 = vmatpush1.bf16.msra.mxu0 0
  %915 = vmatprep.subr.bf16.mxu0 0
  %916 = vmatpush1.bf16.msra.mxu0 0
  %917 = vmatprep.subr.bf16.mxu0 0
  %918 = vmatpush1.bf16.msra.mxu0 0
  %919 = vmatprep.subr.bf16.mxu0 0
  %920 = vmatpush1.bf16.msra.mxu0 0
  %921 = vmatprep.subr.bf16.mxu0 0
  %922 = vmatpush1.bf16.msra.mxu0 0
  %923 = vmatprep.subr.bf16.mxu0 0
  %924 = vmatpush1.bf16.msra.mxu0 0
  %925 = vmatprep.subr.bf16.mxu0 0
  %926 = vmatpush1.bf16.msra.mxu0 0
  %927 = vmatprep.mubr.bf16.mxu0 %v893
  %928 = vmatmul.mubr.bf16.gmra.mrb[0].mxu0 %v888
  %v929 = vpop.f32.mrb[0].mxu0
  %v930 = vadd.f32 0.0, %v929
  %v931 = vpop.f32.mrb[0].mxu0
  %v932 = vadd.f32 0.0, %v931
  %v933 = vpop.f32.mrb[0].mxu0
  %v934 = vadd.f32 0.0, %v933
  %v935 = vpop.f32.mrb[0].mxu0
  %v936 = vadd.f32 0.0, %v935
  %937 = vdwg.mxu0
  %938 = vmatprep.subr.bf16.mxu0 %v813
  %939 = vmatpush1.bf16.msra.mxu0 %v812
  %940 = vmatprep.subr.bf16.mxu0 %v821
  %941 = vmatpush1.bf16.msra.mxu0 %v820
  %942 = vmatprep.subr.bf16.mxu0 %v829
  %943 = vmatpush1.bf16.msra.mxu0 %v828
  %944 = vmatprep.subr.bf16.mxu0 %v837
  %945 = vmatpush1.bf16.msra.mxu0 %v836
  %946 = vmatprep.subr.bf16.mxu0 %v845
  %947 = vmatpush1.bf16.msra.mxu0 %v844
  %948 = vmatprep.subr.bf16.mxu0 %v853
  %949 = vmatpush1.bf16.msra.mxu0 %v852
  %950 = vmatprep.subr.bf16.mxu0 %v861
  %951 = vmatpush1.bf16.msra.mxu0 %v860
  %952 = vmatprep.subr.bf16.mxu0 %v869
  %953 = vmatpush1.bf16.msra.mxu0 %v868
  %954 = vmatprep.subr.bf16.mxu0 %v877
  %955 = vmatpush1.bf16.msra.mxu0 %v876
  %956 = vmatprep.subr.bf16.mxu0 0
  %957 = vmatpush1.bf16.msra.mxu0 0
  %958 = vmatprep.subr.bf16.mxu0 0
  %959 = vmatpush1.bf16.msra.mxu0 0
  %960 = vmatprep.subr.bf16.mxu0 0
  %961 = vmatpush1.bf16.msra.mxu0 0
  %962 = vmatprep.subr.bf16.mxu0 0
  %963 = vmatpush1.bf16.msra.mxu0 0
  %964 = vmatprep.subr.bf16.mxu0 0
  %965 = vmatpush1.bf16.msra.mxu0 0
  %966 = vmatprep.subr.bf16.mxu0 0
  %967 = vmatpush1.bf16.msra.mxu0 0
  %968 = vmatprep.subr.bf16.mxu0 0
  %969 = vmatpush1.bf16.msra.mxu0 0
  %970 = vmatprep.mubr.bf16.mxu0 %v893
  %971 = vmatmul.mubr.bf16.gmra.mrb[0].mxu0 %v888
  %v972 = vpop.f32.mrb[0].mxu0
  %v973 = vadd.f32 0.0, %v972
  %v974 = vpop.f32.mrb[0].mxu0
  %v975 = vadd.f32 0.0, %v974
  %v976 = vpop.f32.mrb[0].mxu0
  %v977 = vadd.f32 0.0, %v976
  %v978 = vpop.f32.mrb[0].mxu0
  %v979 = vadd.f32 0.0, %v978
  %980 = vdwg.mxu0
  %981 = vmatprep.subr.bf16.mxu0 %v815
  %982 = vmatpush1.bf16.msra.mxu0 %v814
  %983 = vmatprep.subr.bf16.mxu0 %v823
  %984 = vmatpush1.bf16.msra.mxu0 %v822
  %985 = vmatprep.subr.bf16.mxu0 %v831
  %986 = vmatpush1.bf16.msra.mxu0 %v830
  %987 = vmatprep.subr.bf16.mxu0 %v839
  %988 = vmatpush1.bf16.msra.mxu0 %v838
  %989 = vmatprep.subr.bf16.mxu0 %v847
  %990 = vmatpush1.bf16.msra.mxu0 %v846
  %991 = vmatprep.subr.bf16.mxu0 %v855
  %992 = vmatpush1.bf16.msra.mxu0 %v854
  %993 = vmatprep.subr.bf16.mxu0 %v863
  %994 = vmatpush1.bf16.msra.mxu0 %v862
  %995 = vmatprep.subr.bf16.mxu0 %v871
  %996 = vmatpush1.bf16.msra.mxu0 %v870
  %997 = vmatprep.subr.bf16.mxu0 %v879
  %998 = vmatpush1.bf16.msra.mxu0 %v878
  %999 = vmatprep.subr.bf16.mxu0 0
  %1000 = vmatpush1.bf16.msra.mxu0 0
  %1001 = vmatprep.subr.bf16.mxu0 0
  %1002 = vmatpush1.bf16.msra.mxu0 0
  %1003 = vmatprep.subr.bf16.mxu0 0
  %1004 = vmatpush1.bf16.msra.mxu0 0
  %1005 = vmatprep.subr.bf16.mxu0 0
  %1006 = vmatpush1.bf16.msra.mxu0 0
  %1007 = vmatprep.subr.bf16.mxu0 0
  %1008 = vmatpush1.bf16.msra.mxu0 0
  %1009 = vmatprep.subr.bf16.mxu0 0
  %1010 = vmatpush1.bf16.msra.mxu0 0
  %1011 = vmatprep.subr.bf16.mxu0 0
  %1012 = vmatpush1.bf16.msra.mxu0 0
  %1013 = vmatprep.mubr.bf16.mxu0 %v893
  %1014 = vmatmul.mubr.bf16.gmra.mrb[0].mxu0 %v888
  %v1015 = vpop.f32.mrb[0].mxu0
  %v1016 = vadd.f32 0.0, %v1015
  %v1017 = vpop.f32.mrb[0].mxu0
  %v1018 = vadd.f32 0.0, %v1017
  %v1019 = vpop.f32.mrb[0].mxu0
  %v1020 = vadd.f32 0.0, %v1019
  %v1021 = vpop.f32.mrb[0].mxu0
  %v1022 = vadd.f32 0.0, %v1021
  %1023 = vdwg.mxu0
  %1024 = vmatprep.subr.bf16.mxu0 %v817
  %1025 = vmatpush1.bf16.msra.mxu0 %v816
  %1026 = vmatprep.subr.bf16.mxu0 %v825
  %1027 = vmatpush1.bf16.msra.mxu0 %v824
  %1028 = vmatprep.subr.bf16.mxu0 %v833
  %1029 = vmatpush1.bf16.msra.mxu0 %v832
  %1030 = vmatprep.subr.bf16.mxu0 %v841
  %1031 = vmatpush1.bf16.msra.mxu0 %v840
  %1032 = vmatprep.subr.bf16.mxu0 %v849
  %1033 = vmatpush1.bf16.msra.mxu0 %v848
  %1034 = vmatprep.subr.bf16.mxu0 %v857
  %1035 = vmatpush1.bf16.msra.mxu0 %v856
  %1036 = vmatprep.subr.bf16.mxu0 %v865
  %1037 = vmatpush1.bf16.msra.mxu0 %v864
  %1038 = vmatprep.subr.bf16.mxu0 %v873
  %1039 = vmatpush1.bf16.msra.mxu0 %v872
  %1040 = vmatprep.subr.bf16.mxu0 %v881
  %1041 = vmatpush1.bf16.msra.mxu0 %v880
  %1042 = vmatprep.subr.bf16.mxu0 0
  %1043 = vmatpush1.bf16.msra.mxu0 0
  %1044 = vmatprep.subr.bf16.mxu0 0
  %1045 = vmatpush1.bf16.msra.mxu0 0
  %1046 = vmatprep.subr.bf16.mxu0 0
  %1047 = vmatpush1.bf16.msra.mxu0 0
  %1048 = vmatprep.subr.bf16.mxu0 0
  %1049 = vmatpush1.bf16.msra.mxu0 0
  %1050 = vmatprep.subr.bf16.mxu0 0
  %1051 = vmatpush1.bf16.msra.mxu0 0
  %1052 = vmatprep.subr.bf16.mxu0 0
  %1053 = vmatpush1.bf16.msra.mxu0 0
  %1054 = vmatprep.subr.bf16.mxu0 0
  %1055 = vmatpush1.bf16.msra.mxu0 0
  %1056 = vmatprep.mubr.bf16.mxu0 %v893
  %1057 = vmatmul.mubr.bf16.gmra.mrb[0].mxu0 %v888
  %v1058 = vpop.f32.mrb[0].mxu0
  %v1059 = vadd.f32 0.0, %v1058
  %v1060 = vpop.f32.mrb[0].mxu0
  %v1061 = vadd.f32 0.0, %v1060
  %v1062 = vpop.f32.mrb[0].mxu0
  %v1063 = vadd.f32 0.0, %v1062
  %v1064 = vpop.f32.mrb[0].mxu0
  %v1065 = vadd.f32 0.0, %v1064
  %1066 = vdwg.mxu0
  %v1068 = vlaneseq
  %v1069 = vshrl.u32 %v1068, 7
  %v1070 = vsub.s32 0, %v1069
  %v1071 = vrot.slane %v30, %v1070
  %v1072 = vlaneseq
  %v1073 = vshrl.u32 %v1072, 7
  %v1074 = vsub.s32 1, %v1073
  %v1075 = vrot.slane %v30, %v1074
  %v1076 = vlaneseq
  %v1077 = vshrl.u32 %v1076, 7
  %v1078 = vsub.s32 2, %v1077
  %v1079 = vrot.slane %v30, %v1078
  %v1080 = vlaneseq
  %v1081 = vshrl.u32 %v1080, 7
  %v1082 = vsub.s32 3, %v1081
  %v1083 = vrot.slane %v30, %v1082
  %v1084 = vlaneseq
  %v1085 = vshrl.u32 %v1084, 7
  %v1086 = vsub.s32 4, %v1085
  %v1087 = vrot.slane %v30, %v1086
  %v1088 = vlaneseq
  %v1089 = vshrl.u32 %v1088, 7
  %v1090 = vsub.s32 5, %v1089
  %v1091 = vrot.slane %v30, %v1090
  %v1092 = vlaneseq
  %v1093 = vshrl.u32 %v1092, 7
  %v1094 = vsub.s32 6, %v1093
  %v1095 = vrot.slane %v30, %v1094
  %v1096 = vlaneseq
  %v1097 = vshrl.u32 %v1096, 7
  %v1098 = vsub.s32 7, %v1097
  %v1099 = vrot.slane %v30, %v1098
  %v1108 = vmul.f32 %v930, %v1071
  %v1109 = vmul.f32 %v932, %v1075
  %v1110 = vmul.f32 %v973, %v1079
  %v1111 = vmul.f32 %v975, %v1083
  %v1112 = vmul.f32 %v1016, %v1087
  %v1113 = vmul.f32 %v1018, %v1091
  %v1114 = vmul.f32 %v1059, %v1095
  %v1115 = vmul.f32 %v1061, %v1099
  %v1116 = vmul.f32 %v934, %v1071
  %v1117 = vmul.f32 %v936, %v1075
  %v1118 = vmul.f32 %v977, %v1079
  %v1119 = vmul.f32 %v979, %v1083
  %v1120 = vmul.f32 %v1020, %v1087
  %v1121 = vmul.f32 %v1022, %v1091
  %v1122 = vmul.f32 %v1063, %v1095
  %v1123 = vmul.f32 %v1065, %v1099
  %v1124 = vadd.f32 %v1108, %v1109
  %v1125 = vadd.f32 %v1124, %v1110
  %v1126 = vadd.f32 %v1125, %v1111
  %v1127 = vadd.f32 %v1126, %v1112
  %v1128 = vadd.f32 %v1127, %v1113
  %v1129 = vadd.f32 %v1128, %v1114
  %v1130 = vadd.f32 %v1129, %v1115
  %1131 = vadd.xlane.f32.xlu0 %v1130
  %v1132 = vpop.xlane.xlu0 %1131
  %v1133 = vadd.f32 %v1116, %v1117
  %v1134 = vadd.f32 %v1133, %v1118
  %v1135 = vadd.f32 %v1134, %v1119
  %v1136 = vadd.f32 %v1135, %v1120
  %v1137 = vadd.f32 %v1136, %v1121
  %v1138 = vadd.f32 %v1137, %v1122
  %v1139 = vadd.f32 %v1138, %v1123
  %1140 = vadd.xlane.f32.xlu0 %v1139
  %v1141 = vpop.xlane.xlu0 %1140
  %v1142 = vmul.f32 %v1108, %v1108
  %v1143 = vmul.f32 %v1109, %v1109
  %v1144 = vmul.f32 %v1110, %v1110
  %v1145 = vmul.f32 %v1111, %v1111
  %v1146 = vmul.f32 %v1112, %v1112
  %v1147 = vmul.f32 %v1113, %v1113
  %v1148 = vmul.f32 %v1114, %v1114
  %v1149 = vmul.f32 %v1115, %v1115
  %v1150 = vmul.f32 %v1116, %v1116
  %v1151 = vmul.f32 %v1117, %v1117
  %v1152 = vmul.f32 %v1118, %v1118
  %v1153 = vmul.f32 %v1119, %v1119
  %v1154 = vmul.f32 %v1120, %v1120
  %v1155 = vmul.f32 %v1121, %v1121
  %v1156 = vmul.f32 %v1122, %v1122
  %v1157 = vmul.f32 %v1123, %v1123
  %v1158 = vadd.f32 %v1142, %v1143
  %v1159 = vadd.f32 %v1158, %v1144
  %v1160 = vadd.f32 %v1159, %v1145
  %v1161 = vadd.f32 %v1160, %v1146
  %v1162 = vadd.f32 %v1161, %v1147
  %v1163 = vadd.f32 %v1162, %v1148
  %v1164 = vadd.f32 %v1163, %v1149
  %1165 = vadd.xlane.f32.xlu0 %v1164
  %v1166 = vpop.xlane.xlu0 %1165
  %v1167 = vadd.f32 %v1150, %v1151
  %v1168 = vadd.f32 %v1167, %v1152
  %v1169 = vadd.f32 %v1168, %v1153
  %v1170 = vadd.f32 %v1169, %v1154
  %v1171 = vadd.f32 %v1170, %v1155
  %v1172 = vadd.f32 %v1171, %v1156
  %v1173 = vadd.f32 %v1172, %v1157
  %1174 = vadd.xlane.f32.xlu0 %v1173
  %v1175 = vpop.xlane.xlu0 %1174
  %v1176 = vmul.f32 %v1132, 0.001953125
  %v1177 = vmul.f32 %v1141, 0.001953125
  %v1178 = vmul.f32 %v1166, 0.001953125
  %v1179 = vmul.f32 %v1175, 0.001953125
  %v1180 = vmul.f32 %v1176, %v1176
  %v1181 = vmul.f32 %v1177, %v1177
  %v1182 = vsub.f32 %v1178, %v1180
  %v1183 = vsub.f32 %v1179, %v1181
  %v1184 = vld [vmem:[%s3] sm:$0xff]
  %v1185 = vld [vmem:[%s3 + $0x8] sm:$0xff]
  %v1186 = vadd.f32 %v1182, 1e-05
  %v1187 = vadd.f32 %v1183, 1e-05
  %v1188 = vrsqrt.pop %v1186
  %v1189 = vrsqrt.pop %v1187
  %v1190 = vmul.f32 %v1184, %v1188
  %v1191 = vmul.f32 %v1185, %v1189
  %v1192 = vld [vmem:[%s4] sm:$0xff]
  %v1193 = vld [vmem:[%s4 + $0x8] sm:$0xff]
  %v1194 = vmul.f32 %v1176, %v1190
  %v1195 = vmul.f32 %v1177, %v1191
  %v1196 = vsub.f32 %v1192, %v1194
  %v1197 = vsub.f32 %v1193, %v1195
  %1199 = vset.pattern.permute.xlu0 0
  %1200 = vperm.xlu0 %1199, %v1190
  %v1201 = vpop.permute.xlu0 %1200
  %1204 = vset.pattern.permute.xlu0 0
  %1205 = vperm.xlu0 %1204, %v1191
  %v1206 = vpop.permute.xlu0 %1205
  %v1208 = vmul.f32 %v930, %v1201
  %v1209 = vmul.f32 %v932, %v1201
  %v1210 = vmul.f32 %v973, %v1201
  %v1211 = vmul.f32 %v975, %v1201
  %v1212 = vmul.f32 %v1016, %v1201
  %v1213 = vmul.f32 %v1018, %v1201
  %v1214 = vmul.f32 %v1059, %v1201
  %v1215 = vmul.f32 %v1061, %v1201
  %v1216 = vmul.f32 %v934, %v1206
  %v1217 = vmul.f32 %v936, %v1206
  %v1218 = vmul.f32 %v977, %v1206
  %v1219 = vmul.f32 %v979, %v1206
  %v1220 = vmul.f32 %v1020, %v1206
  %v1221 = vmul.f32 %v1022, %v1206
  %v1222 = vmul.f32 %v1063, %v1206
  %v1223 = vmul.f32 %v1065, %v1206
  %1225 = vset.pattern.permute.xlu0 0
  %1226 = vperm.xlu0 %1225, %v1196
  %v1227 = vpop.permute.xlu0 %1226
  %1230 = vset.pattern.permute.xlu0 0
  %1231 = vperm.xlu0 %1230, %v1197
  %v1232 = vpop.permute.xlu0 %1231
  %v1234 = vadd.f32 %v1208, %v1227
  %v1235 = vadd.f32 %v1209, %v1227
  %v1236 = vadd.f32 %v1210, %v1227
  %v1237 = vadd.f32 %v1211, %v1227
  %v1238 = vadd.f32 %v1212, %v1227
  %v1239 = vadd.f32 %v1213, %v1227
  %v1240 = vadd.f32 %v1214, %v1227
  %v1241 = vadd.f32 %v1215, %v1227
  %v1242 = vadd.f32 %v1216, %v1232
  %v1243 = vadd.f32 %v1217, %v1232
  %v1244 = vadd.f32 %v1218, %v1232
  %v1245 = vadd.f32 %v1219, %v1232
  %v1246 = vadd.f32 %v1220, %v1232
  %v1247 = vadd.f32 %v1221, %v1232
  %v1248 = vadd.f32 %v1222, %v1232
  %v1249 = vadd.f32 %v1223, %v1232
  %v1250 = vmax.f32 %v1234, 0.0
  %v1251 = vmax.f32 %v1235, 0.0
  %v1252 = vmax.f32 %v1236, 0.0
  %v1253 = vmax.f32 %v1237, 0.0
  %v1254 = vmax.f32 %v1238, 0.0
  %v1255 = vmax.f32 %v1239, 0.0
  %v1256 = vmax.f32 %v1240, 0.0
  %v1257 = vmax.f32 %v1241, 0.0
  %v1258 = vmax.f32 %v1242, 0.0
  %v1259 = vmax.f32 %v1243, 0.0
  %v1260 = vmax.f32 %v1244, 0.0
  %v1261 = vmax.f32 %v1245, 0.0
  %v1262 = vmax.f32 %v1246, 0.0
  %v1263 = vmax.f32 %v1247, 0.0
  %v1264 = vmax.f32 %v1248, 0.0
  %v1265 = vmax.f32 %v1249, 0.0
  %v1266 = vmul.f32 %v1250, %v1071
  %v1267 = vmul.f32 %v1251, %v1075
  %v1268 = vmul.f32 %v1252, %v1079
  %v1269 = vmul.f32 %v1253, %v1083
  %v1270 = vmul.f32 %v1254, %v1087
  %v1271 = vmul.f32 %v1255, %v1091
  %v1272 = vmul.f32 %v1256, %v1095
  %v1273 = vmul.f32 %v1257, %v1099
  %v1274 = vmul.f32 %v1258, %v1071
  %v1275 = vmul.f32 %v1259, %v1075
  %v1276 = vmul.f32 %v1260, %v1079
  %v1277 = vmul.f32 %v1261, %v1083
  %v1278 = vmul.f32 %v1262, %v1087
  %v1279 = vmul.f32 %v1263, %v1091
  %v1280 = vmul.f32 %v1264, %v1095
  %v1281 = vmul.f32 %v1265, %v1099
  %v1282 = vpack.c.bf16 %v1274, %v1266
  %v1283 = vpack.c.bf16 %v1275, %v1267
  %v1284 = vpack.c.bf16 %v1276, %v1268
  %v1285 = vpack.c.bf16 %v1277, %v1269
  %v1286 = vpack.c.bf16 %v1278, %v1270
  %v1287 = vpack.c.bf16 %v1279, %v1271
  %v1288 = vpack.c.bf16 %v1280, %v1272
  %v1289 = vpack.c.bf16 %v1281, %v1273
  %1290 = vst [vmem:[#allocation2] sm:$0xff] %v1282
  %1291 = vst [vmem:[#allocation2 + $0x8] sm:$0xff] %v1283
  %1292 = vst [vmem:[#allocation2 + $0x10] sm:$0xff] %v1284
  %1293 = vst [vmem:[#allocation2 + $0x18] sm:$0xff] %v1285
  %1294 = vst [vmem:[#allocation2 + $0x20] sm:$0xff] %v1286
  %1295 = vst [vmem:[#allocation2 + $0x28] sm:$0xff] %v1287
  %1296 = vst [vmem:[#allocation2 + $0x30] sm:$0xff] %v1288
  %1297 = vst [vmem:[#allocation2 + $0x38] sm:$0xff] %v1289
  %v1298 = vld [vmem:[#allocation2] sm:$0xff]
  %v1299 = vld [vmem:[#allocation2 + $0x8] sm:$0xff]
  %v1300 = vld [vmem:[#allocation2 + $0x10] sm:$0xff]
  %v1301 = vld [vmem:[#allocation2 + $0x18] sm:$0xff]
  %v1302 = vld [vmem:[#allocation2 + $0x20] sm:$0xff]
  %v1303 = vld [vmem:[#allocation2 + $0x28] sm:$0xff]
  %v1304 = vld [vmem:[#allocation2 + $0x30] sm:$0xff]
  %1312 = vrot.lane.b32.xlu0 %v1298, 19
  %v1313 = vpop.permute.xlu0 %1312
  %1314 = vrot.lane.b32.xlu0 %v1299, 19
  %v1315 = vpop.permute.xlu0 %1314
  %1316 = vrot.lane.b32.xlu0 %v1300, 19
  %v1317 = vpop.permute.xlu0 %1316
  %1318 = vrot.lane.b32.xlu0 %v1301, 19
  %v1319 = vpop.permute.xlu0 %1318
  %1320 = vrot.lane.b32.xlu0 %v1302, 19
  %v1321 = vpop.permute.xlu0 %1320
  %1322 = vrot.lane.b32.xlu0 %v1303, 19
  %v1323 = vpop.permute.xlu0 %1322
  %1324 = vrot.lane.b32.xlu0 %v1304, 19
  %v1325 = vpop.permute.xlu0 %1324
  %v1326 = vsel %vm97, %v1313, %v1315
  %v1327 = vsel %vm97, %v1315, %v1317
  %v1328 = vsel %vm97, %v1317, %v1319
  %v1329 = vsel %vm97, %v1319, %v1321
  %v1330 = vsel %vm97, %v1321, %v1323
  %v1331 = vsel %vm97, %v1323, %v1325
  %1338 = vst [vmem:[#allocation3] sm:$0xff] %v1326
  %1339 = vst [vmem:[#allocation3 + $0x8] sm:$0xff] %v1327
  %1340 = vst [vmem:[#allocation3 + $0x10] sm:$0xff] %v1328
  %1341 = vst [vmem:[#allocation3 + $0x18] sm:$0xff] %v1329
  %1342 = vst [vmem:[#allocation3 + $0x20] sm:$0xff] %v1330
  %1343 = vst [vmem:[#allocation3 + $0x28] sm:$0xff] %v1331
  %v1344 = vld [vmem:[#allocation2] sm:$0xff]
  %v1345 = vld [vmem:[#allocation2 + $0x8] sm:$0xff]
  %v1346 = vld [vmem:[#allocation2 + $0x10] sm:$0xff]
  %v1347 = vld [vmem:[#allocation2 + $0x18] sm:$0xff]
  %v1348 = vld [vmem:[#allocation2 + $0x20] sm:$0xff]
  %v1349 = vld [vmem:[#allocation2 + $0x28] sm:$0xff]
  %v1350 = vld [vmem:[#allocation2 + $0x30] sm:$0xff]
  %1358 = vrot.lane.b32.xlu0 %v1344, 18
  %v1359 = vpop.permute.xlu0 %1358
  %1360 = vrot.lane.b32.xlu0 %v1345, 18
  %v1361 = vpop.permute.xlu0 %1360
  %1362 = vrot.lane.b32.xlu0 %v1346, 18
  %v1363 = vpop.permute.xlu0 %1362
  %1364 = vrot.lane.b32.xlu0 %v1347, 18
  %v1365 = vpop.permute.xlu0 %1364
  %1366 = vrot.lane.b32.xlu0 %v1348, 18
  %v1367 = vpop.permute.xlu0 %1366
  %1368 = vrot.lane.b32.xlu0 %v1349, 18
  %v1369 = vpop.permute.xlu0 %1368
  %1370 = vrot.lane.b32.xlu0 %v1350, 18
  %v1371 = vpop.permute.xlu0 %1370
  %v1372 = vsel %vm187, %v1359, %v1361
  %v1373 = vsel %vm187, %v1361, %v1363
  %v1374 = vsel %vm187, %v1363, %v1365
  %v1375 = vsel %vm187, %v1365, %v1367
  %v1376 = vsel %vm187, %v1367, %v1369
  %v1377 = vsel %vm187, %v1369, %v1371
  %1384 = vst [vmem:[#allocation3 + $0x40] sm:$0xff] %v1372
  %1385 = vst [vmem:[#allocation3 + $0x48] sm:$0xff] %v1373
  %1386 = vst [vmem:[#allocation3 + $0x50] sm:$0xff] %v1374
  %1387 = vst [vmem:[#allocation3 + $0x58] sm:$0xff] %v1375
  %1388 = vst [vmem:[#allocation3 + $0x60] sm:$0xff] %v1376
  %1389 = vst [vmem:[#allocation3 + $0x68] sm:$0xff] %v1377
  %v1390 = vld [vmem:[#allocation2] sm:$0xff]
  %v1391 = vld [vmem:[#allocation2 + $0x8] sm:$0xff]
  %v1392 = vld [vmem:[#allocation2 + $0x10] sm:$0xff]
  %v1393 = vld [vmem:[#allocation2 + $0x18] sm:$0xff]
  %v1394 = vld [vmem:[#allocation2 + $0x20] sm:$0xff]
  %v1395 = vld [vmem:[#allocation2 + $0x28] sm:$0xff]
  %v1396 = vld [vmem:[#allocation2 + $0x30] sm:$0xff]
  %1404 = vrot.lane.b32.xlu0 %v1390, 17
  %v1405 = vpop.permute.xlu0 %1404
  %1406 = vrot.lane.b32.xlu0 %v1391, 17
  %v1407 = vpop.permute.xlu0 %1406
  %1408 = vrot.lane.b32.xlu0 %v1392, 17
  %v1409 = vpop.permute.xlu0 %1408
  %1410 = vrot.lane.b32.xlu0 %v1393, 17
  %v1411 = vpop.permute.xlu0 %1410
  %1412 = vrot.lane.b32.xlu0 %v1394, 17
  %v1413 = vpop.permute.xlu0 %1412
  %1414 = vrot.lane.b32.xlu0 %v1395, 17
  %v1415 = vpop.permute.xlu0 %1414
  %1416 = vrot.lane.b32.xlu0 %v1396, 17
  %v1417 = vpop.permute.xlu0 %1416
  %v1418 = vsel %vm277, %v1405, %v1407
  %v1419 = vsel %vm277, %v1407, %v1409
  %v1420 = vsel %vm277, %v1409, %v1411
  %v1421 = vsel %vm277, %v1411, %v1413
  %v1422 = vsel %vm277, %v1413, %v1415
  %v1423 = vsel %vm277, %v1415, %v1417
  %1430 = vst [vmem:[#allocation3 + $0x80] sm:$0xff] %v1418
  %1431 = vst [vmem:[#allocation3 + $0x88] sm:$0xff] %v1419
  %1432 = vst [vmem:[#allocation3 + $0x90] sm:$0xff] %v1420
  %1433 = vst [vmem:[#allocation3 + $0x98] sm:$0xff] %v1421
  %1434 = vst [vmem:[#allocation3 + $0xa0] sm:$0xff] %v1422
  %1435 = vst [vmem:[#allocation3 + $0xa8] sm:$0xff] %v1423
  %v1436 = vld [vmem:[#allocation2] sm:$0xff]
  %v1437 = vld [vmem:[#allocation2 + $0x8] sm:$0xff]
  %v1438 = vld [vmem:[#allocation2 + $0x10] sm:$0xff]
  %v1439 = vld [vmem:[#allocation2 + $0x18] sm:$0xff]
  %v1440 = vld [vmem:[#allocation2 + $0x20] sm:$0xff]
  %v1441 = vld [vmem:[#allocation2 + $0x28] sm:$0xff]
  %v1442 = vld [vmem:[#allocation2 + $0x30] sm:$0xff]
  %1450 = vrot.lane.b32.xlu0 %v1436, 1
  %v1451 = vpop.permute.xlu0 %1450
  %1452 = vrot.lane.b32.xlu0 %v1437, 1
  %v1453 = vpop.permute.xlu0 %1452
  %1454 = vrot.lane.b32.xlu0 %v1438, 1
  %v1455 = vpop.permute.xlu0 %1454
  %1456 = vrot.lane.b32.xlu0 %v1439, 1
  %v1457 = vpop.permute.xlu0 %1456
  %1458 = vrot.lane.b32.xlu0 %v1440, 1
  %v1459 = vpop.permute.xlu0 %1458
  %1460 = vrot.lane.b32.xlu0 %v1441, 1
  %v1461 = vpop.permute.xlu0 %1460
  %1462 = vrot.lane.b32.xlu0 %v1442, 1
  %v1463 = vpop.permute.xlu0 %1462
  %v1464 = vsel %vm367, %v1451, %v1453
  %v1465 = vsel %vm367, %v1453, %v1455
  %v1466 = vsel %vm367, %v1455, %v1457
  %v1467 = vsel %vm367, %v1457, %v1459
  %v1468 = vsel %vm367, %v1459, %v1461
  %v1469 = vsel %vm367, %v1461, %v1463
  %1476 = vst [vmem:[#allocation3 + $0xc0] sm:$0xff] %v1464
  %1477 = vst [vmem:[#allocation3 + $0xc8] sm:$0xff] %v1465
  %1478 = vst [vmem:[#allocation3 + $0xd0] sm:$0xff] %v1466
  %1479 = vst [vmem:[#allocation3 + $0xd8] sm:$0xff] %v1467
  %1480 = vst [vmem:[#allocation3 + $0xe0] sm:$0xff] %v1468
  %1481 = vst [vmem:[#allocation3 + $0xe8] sm:$0xff] %v1469
  %v1482 = vld [vmem:[#allocation2 + $0x8] sm:$0xff]
  %v1483 = vld [vmem:[#allocation2 + $0x10] sm:$0xff]
  %v1484 = vld [vmem:[#allocation2 + $0x18] sm:$0xff]
  %v1485 = vld [vmem:[#allocation2 + $0x20] sm:$0xff]
  %v1486 = vld [vmem:[#allocation2 + $0x28] sm:$0xff]
  %v1487 = vld [vmem:[#allocation2 + $0x30] sm:$0xff]
  %1488 = vst [vmem:[#allocation3 + $0x100] sm:$0xff] %v1482
  %1489 = vst [vmem:[#allocation3 + $0x108] sm:$0xff] %v1483
  %1490 = vst [vmem:[#allocation3 + $0x110] sm:$0xff] %v1484
  %1491 = vst [vmem:[#allocation3 + $0x118] sm:$0xff] %v1485
  %1492 = vst [vmem:[#allocation3 + $0x120] sm:$0xff] %v1486
  %1493 = vst [vmem:[#allocation3 + $0x128] sm:$0xff] %v1487
  %v1494 = vld [vmem:[#allocation2 + $0x8] sm:$0xff]
  %v1495 = vld [vmem:[#allocation2 + $0x10] sm:$0xff]
  %v1496 = vld [vmem:[#allocation2 + $0x18] sm:$0xff]
  %v1497 = vld [vmem:[#allocation2 + $0x20] sm:$0xff]
  %v1498 = vld [vmem:[#allocation2 + $0x28] sm:$0xff]
  %v1499 = vld [vmem:[#allocation2 + $0x30] sm:$0xff]
  %v1500 = vld [vmem:[#allocation2 + $0x38] sm:$0xff]
  %1508 = vrot.lane.b32.xlu0 %v1494, 127
  %v1509 = vpop.permute.xlu0 %1508
  %1510 = vrot.lane.b32.xlu0 %v1495, 127
  %v1511 = vpop.permute.xlu0 %1510
  %1512 = vrot.lane.b32.xlu0 %v1496, 127
  %v1513 = vpop.permute.xlu0 %1512
  %1514 = vrot.lane.b32.xlu0 %v1497, 127
  %v1515 = vpop.permute.xlu0 %1514
  %1516 = vrot.lane.b32.xlu0 %v1498, 127
  %v1517 = vpop.permute.xlu0 %1516
  %1518 = vrot.lane.b32.xlu0 %v1499, 127
  %v1519 = vpop.permute.xlu0 %1518
  %1520 = vrot.lane.b32.xlu0 %v1500, 127
  %v1521 = vpop.permute.xlu0 %1520
  %v1522 = vsel %vm513, %v1509, %v1511
  %v1523 = vsel %vm513, %v1511, %v1513
  %v1524 = vsel %vm513, %v1513, %v1515
  %v1525 = vsel %vm513, %v1515, %v1517
  %v1526 = vsel %vm513, %v1517, %v1519
  %v1527 = vsel %vm513, %v1519, %v1521
  %1534 = vst [vmem:[#allocation3 + $0x140] sm:$0xff] %v1522
  %1535 = vst [vmem:[#allocation3 + $0x148] sm:$0xff] %v1523
  %1536 = vst [vmem:[#allocation3 + $0x150] sm:$0xff] %v1524
  %1537 = vst [vmem:[#allocation3 + $0x158] sm:$0xff] %v1525
  %1538 = vst [vmem:[#allocation3 + $0x160] sm:$0xff] %v1526
  %1539 = vst [vmem:[#allocation3 + $0x168] sm:$0xff] %v1527
  %v1540 = vld [vmem:[#allocation2 + $0x8] sm:$0xff]
  %v1541 = vld [vmem:[#allocation2 + $0x10] sm:$0xff]
  %v1542 = vld [vmem:[#allocation2 + $0x18] sm:$0xff]
  %v1543 = vld [vmem:[#allocation2 + $0x20] sm:$0xff]
  %v1544 = vld [vmem:[#allocation2 + $0x28] sm:$0xff]
  %v1545 = vld [vmem:[#allocation2 + $0x30] sm:$0xff]
  %v1546 = vld [vmem:[#allocation2 + $0x38] sm:$0xff]
  %1554 = vrot.lane.b32.xlu0 %v1540, 111
  %v1555 = vpop.permute.xlu0 %1554
  %1556 = vrot.lane.b32.xlu0 %v1541, 111
  %v1557 = vpop.permute.xlu0 %1556
  %1558 = vrot.lane.b32.xlu0 %v1542, 111
  %v1559 = vpop.permute.xlu0 %1558
  %1560 = vrot.lane.b32.xlu0 %v1543, 111
  %v1561 = vpop.permute.xlu0 %1560
  %1562 = vrot.lane.b32.xlu0 %v1544, 111
  %v1563 = vpop.permute.xlu0 %1562
  %1564 = vrot.lane.b32.xlu0 %v1545, 111
  %v1565 = vpop.permute.xlu0 %1564
  %1566 = vrot.lane.b32.xlu0 %v1546, 111
  %v1567 = vpop.permute.xlu0 %1566
  %v1568 = vsel %vm603, %v1555, %v1557
  %v1569 = vsel %vm603, %v1557, %v1559
  %v1570 = vsel %vm603, %v1559, %v1561
  %v1571 = vsel %vm603, %v1561, %v1563
  %v1572 = vsel %vm603, %v1563, %v1565
  %v1573 = vsel %vm603, %v1565, %v1567
  %1580 = vst [vmem:[#allocation3 + $0x180] sm:$0xff] %v1568
  %1581 = vst [vmem:[#allocation3 + $0x188] sm:$0xff] %v1569
  %1582 = vst [vmem:[#allocation3 + $0x190] sm:$0xff] %v1570
  %1583 = vst [vmem:[#allocation3 + $0x198] sm:$0xff] %v1571
  %1584 = vst [vmem:[#allocation3 + $0x1a0] sm:$0xff] %v1572
  %1585 = vst [vmem:[#allocation3 + $0x1a8] sm:$0xff] %v1573
  %v1586 = vld [vmem:[#allocation2 + $0x8] sm:$0xff]
  %v1587 = vld [vmem:[#allocation2 + $0x10] sm:$0xff]
  %v1588 = vld [vmem:[#allocation2 + $0x18] sm:$0xff]
  %v1589 = vld [vmem:[#allocation2 + $0x20] sm:$0xff]
  %v1590 = vld [vmem:[#allocation2 + $0x28] sm:$0xff]
  %v1591 = vld [vmem:[#allocation2 + $0x30] sm:$0xff]
  %v1592 = vld [vmem:[#allocation2 + $0x38] sm:$0xff]
  %1600 = vrot.lane.b32.xlu0 %v1586, 110
  %v1601 = vpop.permute.xlu0 %1600
  %1602 = vrot.lane.b32.xlu0 %v1587, 110
  %v1603 = vpop.permute.xlu0 %1602
  %1604 = vrot.lane.b32.xlu0 %v1588, 110
  %v1605 = vpop.permute.xlu0 %1604
  %1606 = vrot.lane.b32.xlu0 %v1589, 110
  %v1607 = vpop.permute.xlu0 %1606
  %1608 = vrot.lane.b32.xlu0 %v1590, 110
  %v1609 = vpop.permute.xlu0 %1608
  %1610 = vrot.lane.b32.xlu0 %v1591, 110
  %v1611 = vpop.permute.xlu0 %1610
  %1612 = vrot.lane.b32.xlu0 %v1592, 110
  %v1613 = vpop.permute.xlu0 %1612
  %v1614 = vsel %vm693, %v1601, %v1603
  %v1615 = vsel %vm693, %v1603, %v1605
  %v1616 = vsel %vm693, %v1605, %v1607
  %v1617 = vsel %vm693, %v1607, %v1609
  %v1618 = vsel %vm693, %v1609, %v1611
  %v1619 = vsel %vm693, %v1611, %v1613
  %1626 = vst [vmem:[#allocation3 + $0x1c0] sm:$0xff] %v1614
  %1627 = vst [vmem:[#allocation3 + $0x1c8] sm:$0xff] %v1615
  %1628 = vst [vmem:[#allocation3 + $0x1d0] sm:$0xff] %v1616
  %1629 = vst [vmem:[#allocation3 + $0x1d8] sm:$0xff] %v1617
  %1630 = vst [vmem:[#allocation3 + $0x1e0] sm:$0xff] %v1618
  %1631 = vst [vmem:[#allocation3 + $0x1e8] sm:$0xff] %v1619
  %v1632 = vld [vmem:[#allocation2 + $0x8] sm:$0xff]
  %v1633 = vld [vmem:[#allocation2 + $0x10] sm:$0xff]
  %v1634 = vld [vmem:[#allocation2 + $0x18] sm:$0xff]
  %v1635 = vld [vmem:[#allocation2 + $0x20] sm:$0xff]
  %v1636 = vld [vmem:[#allocation2 + $0x28] sm:$0xff]
  %v1637 = vld [vmem:[#allocation2 + $0x30] sm:$0xff]
  %v1638 = vld [vmem:[#allocation2 + $0x38] sm:$0xff]
  %1646 = vrot.lane.b32.xlu0 %v1632, 109
  %v1647 = vpop.permute.xlu0 %1646
  %1648 = vrot.lane.b32.xlu0 %v1633, 109
  %v1649 = vpop.permute.xlu0 %1648
  %1650 = vrot.lane.b32.xlu0 %v1634, 109
  %v1651 = vpop.permute.xlu0 %1650
  %1652 = vrot.lane.b32.xlu0 %v1635, 109
  %v1653 = vpop.permute.xlu0 %1652
  %1654 = vrot.lane.b32.xlu0 %v1636, 109
  %v1655 = vpop.permute.xlu0 %1654
  %1656 = vrot.lane.b32.xlu0 %v1637, 109
  %v1657 = vpop.permute.xlu0 %1656
  %1658 = vrot.lane.b32.xlu0 %v1638, 109
  %v1659 = vpop.permute.xlu0 %1658
  %v1660 = vsel %vm783, %v1647, %v1649
  %v1661 = vsel %vm783, %v1649, %v1651
  %v1662 = vsel %vm783, %v1651, %v1653
  %v1663 = vsel %vm783, %v1653, %v1655
  %v1664 = vsel %vm783, %v1655, %v1657
  %v1665 = vsel %vm783, %v1657, %v1659
  %1672 = vst [vmem:[#allocation3 + $0x200] sm:$0xff] %v1660
  %1673 = vst [vmem:[#allocation3 + $0x208] sm:$0xff] %v1661
  %1674 = vst [vmem:[#allocation3 + $0x210] sm:$0xff] %v1662
  %1675 = vst [vmem:[#allocation3 + $0x218] sm:$0xff] %v1663
  %1676 = vst [vmem:[#allocation3 + $0x220] sm:$0xff] %v1664
  %1677 = vst [vmem:[#allocation3 + $0x228] sm:$0xff] %v1665
  %v1678 = vld [vmem:[%s5] sm:$0xff]
  %v1679 = vld [vmem:[%s5 + $0x8] sm:$0xff]
  %v1680 = vld [vmem:[#allocation3] sm:$0xff]
  %v1681 = vld [vmem:[#allocation3 + $0x8] sm:$0xff]
  %v1682 = vld [vmem:[#allocation3 + $0x10] sm:$0xff]
  %v1683 = vld [vmem:[#allocation3 + $0x18] sm:$0xff]
  %v1684 = vld [vmem:[#allocation3 + $0x20] sm:$0xff]
  %v1685 = vld [vmem:[#allocation3 + $0x28] sm:$0xff]
  %v1686 = vld [vmem:[#allocation3 + $0x40] sm:$0xff]
  %v1687 = vld [vmem:[#allocation3 + $0x48] sm:$0xff]
  %v1688 = vld [vmem:[#allocation3 + $0x50] sm:$0xff]
  %v1689 = vld [vmem:[#allocation3 + $0x58] sm:$0xff]
  %v1690 = vld [vmem:[#allocation3 + $0x60] sm:$0xff]
  %v1691 = vld [vmem:[#allocation3 + $0x68] sm:$0xff]
  %v1692 = vld [vmem:[#allocation3 + $0x80] sm:$0xff]
  %v1693 = vld [vmem:[#allocation3 + $0x88] sm:$0xff]
  %v1694 = vld [vmem:[#allocation3 + $0x90] sm:$0xff]
  %v1695 = vld [vmem:[#allocation3 + $0x98] sm:$0xff]
  %v1696 = vld [vmem:[#allocation3 + $0xa0] sm:$0xff]
  %v1697 = vld [vmem:[#allocation3 + $0xa8] sm:$0xff]
  %v1698 = vld [vmem:[#allocation3 + $0xc0] sm:$0xff]
  %v1699 = vld [vmem:[#allocation3 + $0xc8] sm:$0xff]
  %v1700 = vld [vmem:[#allocation3 + $0xd0] sm:$0xff]
  %v1701 = vld [vmem:[#allocation3 + $0xd8] sm:$0xff]
  %v1702 = vld [vmem:[#allocation3 + $0xe0] sm:$0xff]
  %v1703 = vld [vmem:[#allocation3 + $0xe8] sm:$0xff]
  %v1704 = vld [vmem:[#allocation3 + $0x100] sm:$0xff]
  %v1705 = vld [vmem:[#allocation3 + $0x108] sm:$0xff]
  %v1706 = vld [vmem:[#allocation3 + $0x110] sm:$0xff]
  %v1707 = vld [vmem:[#allocation3 + $0x118] sm:$0xff]
  %v1708 = vld [vmem:[#allocation3 + $0x120] sm:$0xff]
  %v1709 = vld [vmem:[#allocation3 + $0x128] sm:$0xff]
  %v1710 = vld [vmem:[#allocation3 + $0x140] sm:$0xff]
  %v1711 = vld [vmem:[#allocation3 + $0x148] sm:$0xff]
  %v1712 = vld [vmem:[#allocation3 + $0x150] sm:$0xff]
  %v1713 = vld [vmem:[#allocation3 + $0x158] sm:$0xff]
  %v1714 = vld [vmem:[#allocation3 + $0x160] sm:$0xff]
  %v1715 = vld [vmem:[#allocation3 + $0x168] sm:$0xff]
  %v1716 = vld [vmem:[#allocation3 + $0x180] sm:$0xff]
  %v1717 = vld [vmem:[#allocation3 + $0x188] sm:$0xff]
  %v1718 = vld [vmem:[#allocation3 + $0x190] sm:$0xff]
  %v1719 = vld [vmem:[#allocation3 + $0x198] sm:$0xff]
  %v1720 = vld [vmem:[#allocation3 + $0x1a0] sm:$0xff]
  %v1721 = vld [vmem:[#allocation3 + $0x1a8] sm:$0xff]
  %v1722 = vld [vmem:[#allocation3 + $0x1c0] sm:$0xff]
  %v1723 = vld [vmem:[#allocation3 + $0x1c8] sm:$0xff]
  %v1724 = vld [vmem:[#allocation3 + $0x1d0] sm:$0xff]
  %v1725 = vld [vmem:[#allocation3 + $0x1d8] sm:$0xff]
  %v1726 = vld [vmem:[#allocation3 + $0x1e0] sm:$0xff]
  %v1727 = vld [vmem:[#allocation3 + $0x1e8] sm:$0xff]
  %v1728 = vld [vmem:[#allocation3 + $0x200] sm:$0xff]
  %v1729 = vld [vmem:[#allocation3 + $0x208] sm:$0xff]
  %v1730 = vld [vmem:[#allocation3 + $0x210] sm:$0xff]
  %v1731 = vld [vmem:[#allocation3 + $0x218] sm:$0xff]
  %v1732 = vld [vmem:[#allocation3 + $0x220] sm:$0xff]
  %v1733 = vld [vmem:[#allocation3 + $0x228] sm:$0xff]
  %v1736 = vunpack.c.l.b16 %v1678
  %v1737 = vunpack.c.h.b16 %v1678
  %v1738 = vunpack.c.l.b16 %v1679
  %v1739 = vunpack.c.h.b16 %v1679
  %v1740 = vpack.c.b16 %v1738, %v1736
  %v1741 = vpack.c.b16 %v1739, %v1737
  %v1744 = vsel %vm891, %v1741, 0
  %1746 = vmatprep.subr.bf16.mxu0 %v1681
  %1747 = vmatpush1.bf16.msra.mxu0 %v1680
  %1748 = vmatprep.subr.bf16.mxu0 %v1687
  %1749 = vmatpush1.bf16.msra.mxu0 %v1686
  %1750 = vmatprep.subr.bf16.mxu0 %v1693
  %1751 = vmatpush1.bf16.msra.mxu0 %v1692
  %1752 = vmatprep.subr.bf16.mxu0 %v1699
  %1753 = vmatpush1.bf16.msra.mxu0 %v1698
  %1754 = vmatprep.subr.bf16.mxu0 %v1705
  %1755 = vmatpush1.bf16.msra.mxu0 %v1704
  %1756 = vmatprep.subr.bf16.mxu0 %v1711
  %1757 = vmatpush1.bf16.msra.mxu0 %v1710
  %1758 = vmatprep.subr.bf16.mxu0 %v1717
  %1759 = vmatpush1.bf16.msra.mxu0 %v1716
  %1760 = vmatprep.subr.bf16.mxu0 %v1723
  %1761 = vmatpush1.bf16.msra.mxu0 %v1722
  %1762 = vmatprep.subr.bf16.mxu0 %v1729
  %1763 = vmatpush1.bf16.msra.mxu0 %v1728
  %1764 = vmatprep.subr.bf16.mxu0 0
  %1765 = vmatpush1.bf16.msra.mxu0 0
  %1766 = vmatprep.subr.bf16.mxu0 0
  %1767 = vmatpush1.bf16.msra.mxu0 0
  %1768 = vmatprep.subr.bf16.mxu0 0
  %1769 = vmatpush1.bf16.msra.mxu0 0
  %1770 = vmatprep.subr.bf16.mxu0 0
  %1771 = vmatpush1.bf16.msra.mxu0 0
  %1772 = vmatprep.subr.bf16.mxu0 0
  %1773 = vmatpush1.bf16.msra.mxu0 0
  %1774 = vmatprep.subr.bf16.mxu0 0
  %1775 = vmatpush1.bf16.msra.mxu0 0
  %1776 = vmatprep.subr.bf16.mxu0 0
  %1777 = vmatpush1.bf16.msra.mxu0 0
  %1778 = vmatprep.mubr.bf16.mxu0 %v1744
  %1779 = vmatmul.mubr.bf16.gmra.mrb[0].mxu0 %v1740
  %v1780 = vpop.f32.mrb[0].mxu0
  %v1781 = vadd.f32 0.0, %v1780
  %v1782 = vpop.f32.mrb[0].mxu0
  %v1783 = vadd.f32 0.0, %v1782
  %v1784 = vpop.f32.mrb[0].mxu0
  %v1785 = vadd.f32 0.0, %v1784
  %v1786 = vpop.f32.mrb[0].mxu0
  %v1787 = vadd.f32 0.0, %v1786
  %1788 = vdwg.mxu0
  %1789 = vmatprep.subr.bf16.mxu0 %v1683
  %1790 = vmatpush1.bf16.msra.mxu0 %v1682
  %1791 = vmatprep.subr.bf16.mxu0 %v1689
  %1792 = vmatpush1.bf16.msra.mxu0 %v1688
  %1793 = vmatprep.subr.bf16.mxu0 %v1695
  %1794 = vmatpush1.bf16.msra.mxu0 %v1694
  %1795 = vmatprep.subr.bf16.mxu0 %v1701
  %1796 = vmatpush1.bf16.msra.mxu0 %v1700
  %1797 = vmatprep.subr.bf16.mxu0 %v1707
  %1798 = vmatpush1.bf16.msra.mxu0 %v1706
  %1799 = vmatprep.subr.bf16.mxu0 %v1713
  %1800 = vmatpush1.bf16.msra.mxu0 %v1712
  %1801 = vmatprep.subr.bf16.mxu0 %v1719
  %1802 = vmatpush1.bf16.msra.mxu0 %v1718
  %1803 = vmatprep.subr.bf16.mxu0 %v1725
  %1804 = vmatpush1.bf16.msra.mxu0 %v1724
  %1805 = vmatprep.subr.bf16.mxu0 %v1731
  %1806 = vmatpush1.bf16.msra.mxu0 %v1730
  %1807 = vmatprep.subr.bf16.mxu0 0
  %1808 = vmatpush1.bf16.msra.mxu0 0
  %1809 = vmatprep.subr.bf16.mxu0 0
  %1810 = vmatpush1.bf16.msra.mxu0 0
  %1811 = vmatprep.subr.bf16.mxu0 0
  %1812 = vmatpush1.bf16.msra.mxu0 0
  %1813 = vmatprep.subr.bf16.mxu0 0
  %1814 = vmatpush1.bf16.msra.mxu0 0
  %1815 = vmatprep.subr.bf16.mxu0 0
  %1816 = vmatpush1.bf16.msra.mxu0 0
  %1817 = vmatprep.subr.bf16.mxu0 0
  %1818 = vmatpush1.bf16.msra.mxu0 0
  %1819 = vmatprep.subr.bf16.mxu0 0
  %1820 = vmatpush1.bf16.msra.mxu0 0
  %1821 = vmatprep.mubr.bf16.mxu0 %v1744
  %1822 = vmatmul.mubr.bf16.gmra.mrb[0].mxu0 %v1740
  %v1823 = vpop.f32.mrb[0].mxu0
  %v1824 = vadd.f32 0.0, %v1823
  %v1825 = vpop.f32.mrb[0].mxu0
  %v1826 = vadd.f32 0.0, %v1825
  %v1827 = vpop.f32.mrb[0].mxu0
  %v1828 = vadd.f32 0.0, %v1827
  %v1829 = vpop.f32.mrb[0].mxu0
  %v1830 = vadd.f32 0.0, %v1829
  %1831 = vdwg.mxu0
  %1832 = vmatprep.subr.bf16.mxu0 %v1685
  %1833 = vmatpush1.bf16.msra.mxu0 %v1684
  %1834 = vmatprep.subr.bf16.mxu0 %v1691
  %1835 = vmatpush1.bf16.msra.mxu0 %v1690
  %1836 = vmatprep.subr.bf16.mxu0 %v1697
  %1837 = vmatpush1.bf16.msra.mxu0 %v1696
  %1838 = vmatprep.subr.bf16.mxu0 %v1703
  %1839 = vmatpush1.bf16.msra.mxu0 %v1702
  %1840 = vmatprep.subr.bf16.mxu0 %v1709
  %1841 = vmatpush1.bf16.msra.mxu0 %v1708
  %1842 = vmatprep.subr.bf16.mxu0 %v1715
  %1843 = vmatpush1.bf16.msra.mxu0 %v1714
  %1844 = vmatprep.subr.bf16.mxu0 %v1721
  %1845 = vmatpush1.bf16.msra.mxu0 %v1720
  %1846 = vmatprep.subr.bf16.mxu0 %v1727
  %1847 = vmatpush1.bf16.msra.mxu0 %v1726
  %1848 = vmatprep.subr.bf16.mxu0 %v1733
  %1849 = vmatpush1.bf16.msra.mxu0 %v1732
  %1850 = vmatprep.subr.bf16.mxu0 0
  %1851 = vmatpush1.bf16.msra.mxu0 0
  %1852 = vmatprep.subr.bf16.mxu0 0
  %1853 = vmatpush1.bf16.msra.mxu0 0
  %1854 = vmatprep.subr.bf16.mxu0 0
  %1855 = vmatpush1.bf16.msra.mxu0 0
  %1856 = vmatprep.subr.bf16.mxu0 0
  %1857 = vmatpush1.bf16.msra.mxu0 0
  %1858 = vmatprep.subr.bf16.mxu0 0
  %1859 = vmatpush1.bf16.msra.mxu0 0
  %1860 = vmatprep.subr.bf16.mxu0 0
  %1861 = vmatpush1.bf16.msra.mxu0 0
  %1862 = vmatprep.subr.bf16.mxu0 0
  %1863 = vmatpush1.bf16.msra.mxu0 0
  %1864 = vmatprep.mubr.bf16.mxu0 %v1744
  %1865 = vmatmul.mubr.bf16.gmra.mrb[0].mxu0 %v1740
  %v1866 = vpop.f32.mrb[0].mxu0
  %v1867 = vadd.f32 0.0, %v1866
  %v1868 = vpop.f32.mrb[0].mxu0
  %v1869 = vadd.f32 0.0, %v1868
  %v1870 = vpop.f32.mrb[0].mxu0
  %v1871 = vadd.f32 0.0, %v1870
  %v1872 = vpop.f32.mrb[0].mxu0
  %v1873 = vadd.f32 0.0, %v1872
  %1874 = vdwg.mxu0
  %v1876 = vlaneseq
  %v1877 = vshrl.u32 %v1876, 7
  %v1878 = vsub.s32 0, %v1877
  %v1879 = vrot.slane %v31, %v1878
  %v1880 = vlaneseq
  %v1881 = vshrl.u32 %v1880, 7
  %v1882 = vsub.s32 1, %v1881
  %v1883 = vrot.slane %v31, %v1882
  %v1884 = vlaneseq
  %v1885 = vshrl.u32 %v1884, 7
  %v1886 = vsub.s32 2, %v1885
  %v1887 = vrot.slane %v31, %v1886
  %v1888 = vlaneseq
  %v1889 = vshrl.u32 %v1888, 7
  %v1890 = vsub.s32 3, %v1889
  %v1891 = vrot.slane %v31, %v1890
  %v1892 = vlaneseq
  %v1893 = vshrl.u32 %v1892, 7
  %v1894 = vsub.s32 4, %v1893
  %v1895 = vrot.slane %v31, %v1894
  %v1896 = vlaneseq
  %v1897 = vshrl.u32 %v1896, 7
  %v1898 = vsub.s32 5, %v1897
  %v1899 = vrot.slane %v31, %v1898
  %v1906 = vmul.f32 %v1781, %v1879
  %v1907 = vmul.f32 %v1783, %v1883
  %v1908 = vmul.f32 %v1824, %v1887
  %v1909 = vmul.f32 %v1826, %v1891
  %v1910 = vmul.f32 %v1867, %v1895
  %v1911 = vmul.f32 %v1869, %v1899
  %v1912 = vmul.f32 %v1785, %v1879
  %v1913 = vmul.f32 %v1787, %v1883
  %v1914 = vmul.f32 %v1828, %v1887
  %v1915 = vmul.f32 %v1830, %v1891
  %v1916 = vmul.f32 %v1871, %v1895
  %v1917 = vmul.f32 %v1873, %v1899
  %v1918 = vadd.f32 %v1906, %v1907
  %v1919 = vadd.f32 %v1918, %v1908
  %v1920 = vadd.f32 %v1919, %v1909
  %v1921 = vadd.f32 %v1920, %v1910
  %v1922 = vadd.f32 %v1921, %v1911
  %1923 = vadd.xlane.f32.xlu0 %v1922
  %v1924 = vpop.xlane.xlu0 %1923
  %v1925 = vadd.f32 %v1912, %v1913
  %v1926 = vadd.f32 %v1925, %v1914
  %v1927 = vadd.f32 %v1926, %v1915
  %v1928 = vadd.f32 %v1927, %v1916
  %v1929 = vadd.f32 %v1928, %v1917
  %1930 = vadd.xlane.f32.xlu0 %v1929
  %v1931 = vpop.xlane.xlu0 %1930
  %v1932 = vmul.f32 %v1906, %v1906
  %v1933 = vmul.f32 %v1907, %v1907
  %v1934 = vmul.f32 %v1908, %v1908
  %v1935 = vmul.f32 %v1909, %v1909
  %v1936 = vmul.f32 %v1910, %v1910
  %v1937 = vmul.f32 %v1911, %v1911
  %v1938 = vmul.f32 %v1912, %v1912
  %v1939 = vmul.f32 %v1913, %v1913
  %v1940 = vmul.f32 %v1914, %v1914
  %v1941 = vmul.f32 %v1915, %v1915
  %v1942 = vmul.f32 %v1916, %v1916
  %v1943 = vmul.f32 %v1917, %v1917
  %v1944 = vadd.f32 %v1932, %v1933
  %v1945 = vadd.f32 %v1944, %v1934
  %v1946 = vadd.f32 %v1945, %v1935
  %v1947 = vadd.f32 %v1946, %v1936
  %v1948 = vadd.f32 %v1947, %v1937
  %1949 = vadd.xlane.f32.xlu0 %v1948
  %v1950 = vpop.xlane.xlu0 %1949
  %v1951 = vadd.f32 %v1938, %v1939
  %v1952 = vadd.f32 %v1951, %v1940
  %v1953 = vadd.f32 %v1952, %v1941
  %v1954 = vadd.f32 %v1953, %v1942
  %v1955 = vadd.f32 %v1954, %v1943
  %1956 = vadd.xlane.f32.xlu0 %v1955
  %v1957 = vpop.xlane.xlu0 %1956
  %v1958 = vmul.f32 %v1924, 0.001953125
  %v1959 = vmul.f32 %v1931, 0.001953125
  %v1960 = vmul.f32 %v1950, 0.001953125
  %v1961 = vmul.f32 %v1957, 0.001953125
  %v1962 = vmul.f32 %v1958, %v1958
  %v1963 = vmul.f32 %v1959, %v1959
  %v1964 = vsub.f32 %v1960, %v1962
  %v1965 = vsub.f32 %v1961, %v1963
  %v1966 = vld [vmem:[%s6] sm:$0xff]
  %v1967 = vld [vmem:[%s6 + $0x8] sm:$0xff]
  %v1968 = vadd.f32 %v1964, 1e-05
  %v1969 = vadd.f32 %v1965, 1e-05
  %v1970 = vrsqrt.pop %v1968
  %v1971 = vrsqrt.pop %v1969
  %v1972 = vmul.f32 %v1966, %v1970
  %v1973 = vmul.f32 %v1967, %v1971
  %v1974 = vld [vmem:[%s7] sm:$0xff]
  %v1975 = vld [vmem:[%s7 + $0x8] sm:$0xff]
  %v1976 = vmul.f32 %v1958, %v1972
  %v1977 = vmul.f32 %v1959, %v1973
  %v1978 = vsub.f32 %v1974, %v1976
  %v1979 = vsub.f32 %v1975, %v1977
  %v1980 = vld [vmem:[%s0 + $0x8] sm:$0xff]
  %v1981 = vld [vmem:[%s0 + $0x10] sm:$0xff]
  %v1982 = vld [vmem:[%s0 + $0x18] sm:$0xff]
  %v1983 = vld [vmem:[%s0 + $0x30] sm:$0xff]
  %v1984 = vld [vmem:[%s0 + $0x38] sm:$0xff]
  %v1985 = vld [vmem:[%s0 + $0x40] sm:$0xff]
  %v1986 = vunpack.c.l.bf16 %v1980
  %v1987 = vunpack.c.h.bf16 %v1980
  %v1988 = vunpack.c.l.bf16 %v1981
  %v1989 = vunpack.c.h.bf16 %v1981
  %v1990 = vunpack.c.l.bf16 %v1982
  %v1991 = vunpack.c.h.bf16 %v1982
  %v1992 = vunpack.c.l.bf16 %v1983
  %v1993 = vunpack.c.h.bf16 %v1983
  %v1994 = vunpack.c.l.bf16 %v1984
  %v1995 = vunpack.c.h.bf16 %v1984
  %v1996 = vunpack.c.l.bf16 %v1985
  %v1997 = vunpack.c.h.bf16 %v1985
  %1999 = vset.pattern.permute.xlu0 0
  %2000 = vperm.xlu0 %1999, %v1972
  %v2001 = vpop.permute.xlu0 %2000
  %2004 = vset.pattern.permute.xlu0 0
  %2005 = vperm.xlu0 %2004, %v1973
  %v2006 = vpop.permute.xlu0 %2005
  %v2008 = vmul.f32 %v1781, %v2001
  %v2009 = vmul.f32 %v1783, %v2001
  %v2010 = vmul.f32 %v1824, %v2001
  %v2011 = vmul.f32 %v1826, %v2001
  %v2012 = vmul.f32 %v1867, %v2001
  %v2013 = vmul.f32 %v1869, %v2001
  %v2014 = vmul.f32 %v1785, %v2006
  %v2015 = vmul.f32 %v1787, %v2006
  %v2016 = vmul.f32 %v1828, %v2006
  %v2017 = vmul.f32 %v1830, %v2006
  %v2018 = vmul.f32 %v1871, %v2006
  %v2019 = vmul.f32 %v1873, %v2006
  %2021 = vset.pattern.permute.xlu0 0
  %2022 = vperm.xlu0 %2021, %v1978
  %v2023 = vpop.permute.xlu0 %2022
  %2026 = vset.pattern.permute.xlu0 0
  %2027 = vperm.xlu0 %2026, %v1979
  %v2028 = vpop.permute.xlu0 %2027
  %v2030 = vadd.f32 %v2008, %v2023
  %v2031 = vadd.f32 %v2009, %v2023
  %v2032 = vadd.f32 %v2010, %v2023
  %v2033 = vadd.f32 %v2011, %v2023
  %v2034 = vadd.f32 %v2012, %v2023
  %v2035 = vadd.f32 %v2013, %v2023
  %v2036 = vadd.f32 %v2014, %v2028
  %v2037 = vadd.f32 %v2015, %v2028
  %v2038 = vadd.f32 %v2016, %v2028
  %v2039 = vadd.f32 %v2017, %v2028
  %v2040 = vadd.f32 %v2018, %v2028
  %v2041 = vadd.f32 %v2019, %v2028
  %v2042 = vadd.f32 %v2030, %v1986
  %v2043 = vadd.f32 %v2031, %v1987
  %v2044 = vadd.f32 %v2032, %v1988
  %v2045 = vadd.f32 %v2033, %v1989
  %v2046 = vadd.f32 %v2034, %v1990
  %v2047 = vadd.f32 %v2035, %v1991
  %v2048 = vadd.f32 %v2036, %v1992
  %v2049 = vadd.f32 %v2037, %v1993
  %v2050 = vadd.f32 %v2038, %v1994
  %v2051 = vadd.f32 %v2039, %v1995
  %v2052 = vadd.f32 %v2040, %v1996
  %v2053 = vadd.f32 %v2041, %v1997
  %v2054 = vmax.f32 %v2042, 0.0
  %v2055 = vmax.f32 %v2043, 0.0
  %v2056 = vmax.f32 %v2044, 0.0
  %v2057 = vmax.f32 %v2045, 0.0
  %v2058 = vmax.f32 %v2046, 0.0
  %v2059 = vmax.f32 %v2047, 0.0
  %v2060 = vmax.f32 %v2048, 0.0
  %v2061 = vmax.f32 %v2049, 0.0
  %v2062 = vmax.f32 %v2050, 0.0
  %v2063 = vmax.f32 %v2051, 0.0
  %v2064 = vmax.f32 %v2052, 0.0
  %v2065 = vmax.f32 %v2053, 0.0
  %2066 = vst [vmem:[%s8] sm:$0xff] %v2054
  %2067 = vst [vmem:[%s8 + $0x8] sm:$0xff] %v2055
  %2068 = vst [vmem:[%s8 + $0x10] sm:$0xff] %v2056
  %2069 = vst [vmem:[%s8 + $0x18] sm:$0xff] %v2057
  %2070 = vst [vmem:[%s8 + $0x20] sm:$0xff] %v2058
  %2071 = vst [vmem:[%s8 + $0x28] sm:$0xff] %v2059
  %2072 = vst [vmem:[%s8 + $0x30] sm:$0xff] %v2060
  %2073 = vst [vmem:[%s8 + $0x38] sm:$0xff] %v2061
  %2074 = vst [vmem:[%s8 + $0x40] sm:$0xff] %v2062
  %2075 = vst [vmem:[%s8 + $0x48] sm:$0xff] %v2063
  %2076 = vst [vmem:[%s8 + $0x50] sm:$0xff] %v2064
  %2077 = vst [vmem:[%s8 + $0x58] sm:$0xff] %v2065
  // Predicated region
  $region34: #{trans_basic_block.1} parent=0 // pred_check
    _
  $region35: #{trans_basic_block.1} parent=0 // pred_check_branch
    %2079 = sbr.rel (0) target = $region37
  $region36: #{trans_basic_block.1} parent=0 // pred_region
    _
  $region37: #{trans_basic_block.1} parent=0 // pred_fallthru
    _
  // Predicated region
  $region38: #{trans_basic_block.1} parent=0 // pred_check
    _
  $region39: #{trans_basic_block.1} parent=0 // pred_check_branch
    %2081 = sbr.rel (0) target = $region41
  $region40: #{trans_basic_block.1} parent=0 // pred_region
    _
  $region41: #{trans_basic_block.1} parent=0 // pred_fallthru
    _

</llo_original>
